<compile_context>
chip_gen: v7x
topology: tpu7x:2x2x1
jax: 0.10.0
libtpu: 0.0.40
codegen_flags: <defaults>
</compile_context>

<pallas_src>
import math

import jax
import jax.numpy as jnp
from jax.experimental import pallas as pl
from jax.experimental.pallas import tpu as pltpu


D_IN, D_H1, D_H2, D_OUT = 32, 256, 512, 784


def _round_up(x, m):
    return ((x + m - 1) // m) * m


def decoder_kernel(z_ref, w1_ref, b1_ref, w2_ref, b2_ref, w3_ref, b3_ref, out_ref):
    # Fused 3-layer MLP for one batch tile: matmuls on the MXU (fp32 accumulation),
    # tanh/sigmoid on VPU/EUP. Biases stay fp32.
    z = z_ref[...]

    h1 = jnp.tanh(
        jnp.dot(z, w1_ref[...], preferred_element_type=jnp.float32) + b1_ref[...]
    ).astype(w2_ref.dtype)

    h2 = jnp.tanh(
        jnp.dot(h1, w2_ref[...], preferred_element_type=jnp.float32) + b2_ref[...]
    ).astype(w3_ref.dtype)

    logits = jnp.dot(h2, w3_ref[...], preferred_element_type=jnp.float32) + b3_ref[...]
    out_ref[...] = jax.nn.sigmoid(logits)


def decoder_forward(z, params, *, tm=None, use_bf16=False):
    """z: (B, 32) float32. params: W1,b1,W2,b2,W3,b3 with weights stored (in, out)."""
    assert z.ndim == 2 and z.shape[1] == D_IN, z.shape
    B = z.shape[0]

    # Batch tile: 256 rows (full MXU M-width on v6e/v7x) when the batch is big
    # enough; otherwise a single tile padded to the fp32 sublane multiple of 8.
    if tm is None:
        tm = 256 if B >= 256 else _round_up(max(B, 1), 8)
    Bp = _round_up(B, tm)

    # Lane-dense output: pad 784 -> 896 (7 * 128). Padded columns sliced off below.
    out_pad = _round_up(D_OUT, 128)

    w1, b1 = params["W1"], params["b1"]
    w2, b2 = params["W2"], params["b2"]
    w3 = jnp.pad(params["W3"], ((0, 0), (0, out_pad - D_OUT)))
    b3 = jnp.pad(params["b3"], ((0, 0), (0, out_pad - D_OUT)))

    zp = z if Bp == B else jnp.pad(z, ((0, Bp - B), (0, 0)))

    compute_dtype = jnp.bfloat16 if use_bf16 else jnp.float32
    zp = zp.astype(compute_dtype)
    w1 = w1.astype(compute_dtype)
    w2 = w2.astype(compute_dtype)
    w3 = w3.astype(compute_dtype)
    # Biases remain fp32 and are added to the fp32 MXU accumulators.

    grid = (Bp // tm,)

    def resident(shape):
        # Whole array, same block every grid step -> DMA'd once, VMEM-resident.
        return pl.BlockSpec(shape, lambda i: (0,) * len(shape))

    itemsize = jnp.dtype(compute_dtype).itemsize
    cost = pl.CostEstimate(
        flops=2 * Bp * (D_IN * D_H1 + D_H1 * D_H2 + D_H2 * D_OUT),
        transcendentals=Bp * (D_H1 + D_H2 + D_OUT),
        bytes_accessed=(
            Bp * D_IN * itemsize
            + (D_IN * D_H1 + D_H1 * D_H2 + D_H2 * out_pad) * itemsize
            + (D_H1 + D_H2 + out_pad) * 4
            + Bp * out_pad * 4
        ),
    )

    out = pl.pallas_call(
        decoder_kernel,
        out_shape=jax.ShapeDtypeStruct((Bp, out_pad), jnp.float32),
        grid_spec=pltpu.PrefetchScalarGridSpec(
            num_scalar_prefetch=0,
            grid=grid,
            in_specs=[
                pl.BlockSpec((tm, D_IN), lambda i: (i, 0)),  # activation tile pipelines
                resident(w1.shape), resident(b1.shape),
                resident(w2.shape), resident(b2.shape),
                resident(w3.shape), resident(b3.shape),
            ],
            out_specs=pl.BlockSpec((tm, out_pad), lambda i: (i, 0)),
        ),
        compiler_params=pltpu.CompilerParams(
            dimension_semantics=("parallel",),  # megacore: split batch tiles on v7x
        ),
        cost_estimate=cost,
    )(zp, w1, b1, w2, b2, w3, b3)

    return out[:B, :D_OUT]


def init_params(key):
    """Deterministic init mimicking PyTorch nn.Linear default (uniform +-1/sqrt(fan_in))."""
    dims = [(D_IN, D_H1), (D_H1, D_H2), (D_H2, D_OUT)]
    params = {}
    keys = jax.random.split(key, 2 * len(dims))
    for i, (fan_in, fan_out) in enumerate(dims):
        bound = 1.0 / math.sqrt(fan_in)
        params[f"W{i+1}"] = jax.random.uniform(
            keys[2 * i], (fan_in, fan_out), minval=-bound, maxval=bound,
            dtype=jnp.float32)
        params[f"b{i+1}"] = jax.random.uniform(
            keys[2 * i + 1], (1, fan_out), minval=-bound, maxval=bound,
            dtype=jnp.float32)
    return params


def decoder_ref(z, params):
    """Pure-JAX reference for correctness check."""
    h = jnp.tanh(z @ params["W1"] + params["b1"])
    h = jnp.tanh(h @ params["W2"] + params["b2"])
    return jax.nn.sigmoid(h @ params["W3"] + params["b3"])


if __name__ == "__main__":
    key = jax.random.PRNGKey(0)
    pkey, zkey1, zkey2 = jax.random.split(key, 3)
    params = init_params(pkey)

    # Small batch: single padded tile (grid=(1,)), fp32, exact match vs reference.
    z_small = jax.random.normal(zkey1, (8, D_IN), dtype=jnp.float32)
    out_small = jax.block_until_ready(decoder_forward(z_small, params))
    ref_small = decoder_ref(z_small, params)
    assert out_small.shape == (8, D_OUT), out_small.shape
    assert jnp.allclose(out_small, ref_small, atol=1e-5, rtol=1e-5), "fp32 small mismatch"

    # Ragged batch exercising the batch grid + row padding (300 -> 384, grid=(3,)).
    z_big = jax.random.normal(zkey2, (300, D_IN), dtype=jnp.float32)
    out_big = jax.block_until_ready(decoder_forward(z_big, params, tm=128))
    ref_big = decoder_ref(z_big, params)
    assert out_big.shape == (300, D_OUT), out_big.shape
    assert jnp.allclose(out_big, ref_big, atol=1e-5, rtol=1e-5), "fp32 tiled mismatch"

    # Optional bf16 weights/activations path (fp32 accumulation): looser tolerance.
    out_bf16 = jax.block_until_ready(
        decoder_forward(z_big, params, tm=128, use_bf16=True))
    assert jnp.allclose(out_bf16, ref_big, atol=3e-2, rtol=0), "bf16 path mismatch"

    print("KERNEL_OK")
</pallas_src>

<mosaic_0001>
module attributes {stable_mosaic.version = 11 : i64} {
  func.func @decoder_kernel(%arg0: i32, %arg1: memref<8x32xf32, #tpu.memory_space<vmem>>, %arg2: memref<32x256xf32, #tpu.memory_space<vmem>>, %arg3: memref<1x256xf32, #tpu.memory_space<vmem>>, %arg4: memref<256x512xf32, #tpu.memory_space<vmem>>, %arg5: memref<1x512xf32, #tpu.memory_space<vmem>>, %arg6: memref<512x896xf32, #tpu.memory_space<vmem>>, %arg7: memref<1x896xf32, #tpu.memory_space<vmem>>, %arg8: memref<8x896xf32, #tpu.memory_space<vmem>>) attributes {dimension_semantics = [#tpu.dimension_semantics<parallel>], iteration_bounds = array<i64: 1>, scalar_prefetch = 0 : i64, scratch_operands = 0 : i64, tpu.core_type = #tpu.core_type<tc>, window_params = [{transform_indices = @transform_0, window_bounds = array<i64: 8, 32>}, {pipeline_mode = #tpu.pipeline_mode<synchronous>, transform_indices = @transform_1, window_bounds = array<i64: 32, 256>}, {pipeline_mode = #tpu.pipeline_mode<synchronous>, transform_indices = @transform_2, window_bounds = array<i64: 1, 256>}, {pipeline_mode = #tpu.pipeline_mode<synchronous>, transform_indices = @transform_3, window_bounds = array<i64: 256, 512>}, {pipeline_mode = #tpu.pipeline_mode<synchronous>, transform_indices = @transform_4, window_bounds = array<i64: 1, 512>}, {pipeline_mode = #tpu.pipeline_mode<synchronous>, transform_indices = @transform_5, window_bounds = array<i64: 512, 896>}, {pipeline_mode = #tpu.pipeline_mode<synchronous>, transform_indices = @transform_6, window_bounds = array<i64: 1, 896>}, {transform_indices = @transform_7, window_bounds = array<i64: 8, 896>}]} {
    %c0 = arith.constant 0 : index
    %c0_0 = arith.constant 0 : index
    %0 = vector.load %arg1[%c0, %c0_0] : memref<8x32xf32, #tpu.memory_space<vmem>>, vector<8x32xf32>
    %c0_1 = arith.constant 0 : index
    %c0_2 = arith.constant 0 : index
    %1 = vector.load %arg2[%c0_1, %c0_2] : memref<32x256xf32, #tpu.memory_space<vmem>>, vector<32x256xf32>
    %cst = arith.constant dense<0.000000e+00> : vector<8x256xf32>
    %2 = tpu.matmul %0, %1, %cst {dimension_numbers = #tpu.dot_dimension_numbers<[1], [0], [0], [1], [0, 0, 1, 1], [], []>} : vector<8x32xf32>, vector<32x256xf32>, vector<8x256xf32> -> vector<8x256xf32>
    %c0_3 = arith.constant 0 : index
    %c0_4 = arith.constant 0 : index
    %3 = vector.load %arg3[%c0_3, %c0_4] : memref<1x256xf32, #tpu.memory_space<vmem>>, vector<1x256xf32>
    %4 = vector.broadcast %3 : vector<1x256xf32> to vector<8x256xf32>
    %5 = arith.addf %2, %4 : vector<8x256xf32>
    %6 = math.tanh %5 : vector<8x256xf32>
    %c0_5 = arith.constant 0 : index
    %c0_6 = arith.constant 0 : index
    %7 = vector.load %arg4[%c0_5, %c0_6] : memref<256x512xf32, #tpu.memory_space<vmem>>, vector<256x512xf32>
    %cst_7 = arith.constant dense<0.000000e+00> : vector<8x512xf32>
    %8 = tpu.matmul %6, %7, %cst_7 {dimension_numbers = #tpu.dot_dimension_numbers<[1], [0], [0], [1], [0, 0, 1, 1], [], []>} : vector<8x256xf32>, vector<256x512xf32>, vector<8x512xf32> -> vector<8x512xf32>
    %c0_8 = arith.constant 0 : index
    %c0_9 = arith.constant 0 : index
    %9 = vector.load %arg5[%c0_8, %c0_9] : memref<1x512xf32, #tpu.memory_space<vmem>>, vector<1x512xf32>
    %10 = vector.broadcast %9 : vector<1x512xf32> to vector<8x512xf32>
    %11 = arith.addf %8, %10 : vector<8x512xf32>
    %12 = math.tanh %11 : vector<8x512xf32>
    %c0_10 = arith.constant 0 : index
    %c0_11 = arith.constant 0 : index
    %13 = vector.load %arg6[%c0_10, %c0_11] : memref<512x896xf32, #tpu.memory_space<vmem>>, vector<512x896xf32>
    %cst_12 = arith.constant dense<0.000000e+00> : vector<8x896xf32>
    %14 = tpu.matmul %12, %13, %cst_12 {dimension_numbers = #tpu.dot_dimension_numbers<[1], [0], [0], [1], [0, 0, 1, 1], [], []>} : vector<8x512xf32>, vector<512x896xf32>, vector<8x896xf32> -> vector<8x896xf32>
    %c0_13 = arith.constant 0 : index
    %c0_14 = arith.constant 0 : index
    %15 = vector.load %arg7[%c0_13, %c0_14] : memref<1x896xf32, #tpu.memory_space<vmem>>, vector<1x896xf32>
    %16 = vector.broadcast %15 : vector<1x896xf32> to vector<8x896xf32>
    %17 = arith.addf %14, %16 : vector<8x896xf32>
    %18 = arith.negf %17 : vector<8x896xf32>
    %19 = math.exp %18 : vector<8x896xf32>
    %cst_15 = arith.constant 1.000000e+00 : f32
    %20 = vector.broadcast %cst_15 : f32 to vector<8x896xf32>
    %21 = arith.addf %20, %19 : vector<8x896xf32>
    %22 = arith.divf %20, %21 : vector<8x896xf32>
    %c0_16 = arith.constant 0 : index
    %c0_17 = arith.constant 0 : index
    %23 = vector.load %arg8[%c0_16, %c0_17] : memref<8x896xf32, #tpu.memory_space<vmem>>, vector<8x896xf32>
    tpu.vector_store %arg8[%c0_16, %c0_17], %22 {strides = array<i32>} : memref<8x896xf32, #tpu.memory_space<vmem>>, vector<8x896xf32>,
    return
  }
  func.func @transform_0(%arg0: i32) -> (i32, i32) {
    %c0_i32 = arith.constant 0 : i32
    %c0_i32_0 = arith.constant 0 : i32
    return %arg0, %c0_i32 : i32, i32
  }
  func.func @transform_1(%arg0: i32) -> (i32, i32) {
    %c0_i32 = arith.constant 0 : i32
    %c0_i32_0 = arith.constant 0 : i32
    %c0_i32_1 = arith.constant 0 : i32
    return %c0_i32, %c0_i32_0 : i32, i32
  }
  func.func @transform_2(%arg0: i32) -> (i32, i32) {
    %c0_i32 = arith.constant 0 : i32
    %c0_i32_0 = arith.constant 0 : i32
    %c0_i32_1 = arith.constant 0 : i32
    return %c0_i32, %c0_i32_0 : i32, i32
  }
  func.func @transform_3(%arg0: i32) -> (i32, i32) {
    %c0_i32 = arith.constant 0 : i32
    %c0_i32_0 = arith.constant 0 : i32
    %c0_i32_1 = arith.constant 0 : i32
    return %c0_i32, %c0_i32_0 : i32, i32
  }
  func.func @transform_4(%arg0: i32) -> (i32, i32) {
    %c0_i32 = arith.constant 0 : i32
    %c0_i32_0 = arith.constant 0 : i32
    %c0_i32_1 = arith.constant 0 : i32
    return %c0_i32, %c0_i32_0 : i32, i32
  }
  func.func @transform_5(%arg0: i32) -> (i32, i32) {
    %c0_i32 = arith.constant 0 : i32
    %c0_i32_0 = arith.constant 0 : i32
    %c0_i32_1 = arith.constant 0 : i32
    return %c0_i32, %c0_i32_0 : i32, i32
  }
  func.func @transform_6(%arg0: i32) -> (i32, i32) {
    %c0_i32 = arith.constant 0 : i32
    %c0_i32_0 = arith.constant 0 : i32
    %c0_i32_1 = arith.constant 0 : i32
    return %c0_i32, %c0_i32_0 : i32, i32
  }
  func.func @transform_7(%arg0: i32) -> (i32, i32) {
    %c0_i32 = arith.constant 0 : i32
    %c0_i32_0 = arith.constant 0 : i32
    return %arg0, %c0_i32 : i32, i32
  }
}

</mosaic_0001>

<llo_original>
// kernel: tpu_custom_call.1
$region0: #{tpu_custom_call.1}
  #allocation0 [shape = 'u32[]', space=smem, size = 0x4, offset = 0x4, fixed_abs, tag = 'smem constant byte address 0x4 - core index']
  #allocation1 [shape = 'u32[144,128]{1,0:T(1,128)}', space=vmem, size = 0x12000, scoped, tag = 'internal scratch']
  %s0 = inlined_call_operand.hbm [shape: f32[8,32], index: 0, kind: input, shape index: {}]
  %s1 = inlined_call_operand.hbm [shape: f32[32,256], index: 1, kind: input, shape index: {}]
  %s2 = inlined_call_operand.hbm [shape: f32[1,256], index: 2, kind: input, shape index: {}]
  %s3 = inlined_call_operand.hbm [shape: f32[256,512], index: 3, kind: input, shape index: {}]
  %s4 = inlined_call_operand.hbm [shape: f32[1,512], index: 4, kind: input, shape index: {}]
  %s5 = inlined_call_operand.hbm [shape: f32[512,896], index: 5, kind: input, shape index: {}]
  %s6 = inlined_call_operand.hbm [shape: f32[1,896], index: 6, kind: input, shape index: {}]
  %s7 = inlined_call_operand.hbm [shape: f32[8,896], index: 7, kind: output, shape index: {}]
  %s8 = sld [smem:[#allocation0]]
  $region66: #{tpu_custom_call.1} parent=0
    _
  %s10 = ssub.s32 1, %s8
  %s11 = scalar_select 0, %s10, %s8
  $region1: #{tpu_custom_call.1} parent=0
    #allocation2 [shape = 'u8[4096]{0}', space=vmem, size = 0x1000, scoped, tag = 'input window, operand 0, single buffered']
    #allocation3 [shape = 's32[1]{0}', space=sflag, size = 0x4, scoped, tag = 'scoped memory for tpu_custom_call.1']
    #allocation4 [shape = 's32[1]{0}', space=sflag, size = 0x4, scoped, tag = 'scoped memory for tpu_custom_call.1']
    #allocation5 [shape = 'u8[32768]{0}', space=vmem, size = 0x8000, scoped, tag = 'input window, operand 1, single buffered']
    #allocation6 [shape = 's32[1]{0}', space=sflag, size = 0x4, scoped, tag = 'scoped memory for tpu_custom_call.1']
    #allocation7 [shape = 'u8[1024]{0}', space=vmem, size = 0x400, scoped, tag = 'input window, operand 2, single buffered']
    #allocation8 [shape = 'u8[524288]{0}', space=vmem, size = 0x80000, scoped, tag = 'input window, operand 3, single buffered']
    #allocation9 [shape = 's32[1]{0}', space=sflag, size = 0x4, scoped, tag = 'scoped memory for tpu_custom_call.1']
    #allocation10 [shape = 'u8[2048]{0}', space=vmem, size = 0x800, scoped, tag = 'input window, operand 4, single buffered']
    #allocation11 [shape = 'u8[1835008]{0}', space=vmem, size = 0x1c0000, scoped, tag = 'input window, operand 5, single buffered']
    #allocation12 [shape = 's32[1]{0}', space=sflag, size = 0x4, scoped, tag = 'scoped memory for tpu_custom_call.1']
    #allocation13 [shape = 'u8[3584]{0}', space=vmem, size = 0x1000, scoped, tag = 'input window, operand 6, single buffered']
    #allocation14 [shape = 'u8[28672]{0}', space=vmem, size = 0x7000, scoped, tag = 'output window, operand 0, single buffered']
    %12 = vsyncpa [#allocation3], 0
    %13 = vsyncpa [#allocation6], 0
    %14 = vsyncpa [#allocation9], 0
    %15 = vsyncpa [#allocation12], 0
    %16 = vsyncpa [#allocation4], 0
    // Predicated region
    $region2: #{tpu_custom_call.1} parent=1 // pred_check
      _
    $region3: #{tpu_custom_call.1} parent=1 // pred_check_branch
      %18 = sbr.rel (0) target = $region5
    $region4: #{tpu_custom_call.1} parent=1 // pred_region
      %s20 = ssub.s32 128, 128
      %21 = vsyncadd [#allocation3], %s20
      %s23 = sshll.u32 [#allocation2], 4
      %s24 = int_to_ptr.vmem [resolvable:$true] %s23
      %26 = dma.hbm_to_vmem [thread:$0]  %s0, 128, %s24, [#allocation3]
    $region5: #{tpu_custom_call.1} parent=1 // pred_fallthru
      _
    // Predicated region
    $region6: #{tpu_custom_call.1} parent=1 // pred_check
      _
    $region7: #{tpu_custom_call.1} parent=1 // pred_check_branch
      %28 = sbr.rel (0) target = $region9
    $region8: #{tpu_custom_call.1} parent=1 // pred_region
      %s30 = ssub.s32 1024, 1024
      %31 = vsyncadd [#allocation6], %s30
      %s32 = sshll.u32 [#allocation5], 4
      %s33 = int_to_ptr.vmem [resolvable:$true] %s32
      %38 = dma.hbm_to_vmem [thread:$0]  %s1, 1024, %s33, [#allocation6], 256, 256, 16
    $region9: #{tpu_custom_call.1} parent=1 // pred_fallthru
      _
    // Predicated region
    $region10: #{tpu_custom_call.1} parent=1 // pred_check
      _
    $region11: #{tpu_custom_call.1} parent=1 // pred_check_branch
      %40 = sbr.rel (0) target = $region13
    $region12: #{tpu_custom_call.1} parent=1 // pred_region
      %s42 = ssub.s32 32, 32
      %43 = vsyncadd [#allocation6], %s42
      %s45 = sshll.u32 [#allocation7], 4
      %s46 = int_to_ptr.vmem [resolvable:$true] %s45
      %48 = dma.hbm_to_vmem [thread:$0]  %s2, 32, %s46, [#allocation6]
    $region13: #{tpu_custom_call.1} parent=1 // pred_fallthru
      _
    // Predicated region
    $region14: #{tpu_custom_call.1} parent=1 // pred_check
      _
    $region15: #{tpu_custom_call.1} parent=1 // pred_check_branch
      %50 = sbr.rel (0) target = $region17
    $region16: #{tpu_custom_call.1} parent=1 // pred_region
      %s52 = ssub.s32 16384, 16384
      %53 = vsyncadd [#allocation9], %s52
      %s54 = sshll.u32 [#allocation8], 4
      %s55 = int_to_ptr.vmem [resolvable:$true] %s54
      %60 = dma.hbm_to_vmem [thread:$0]  %s3, 16384, %s55, [#allocation9], 512, 512, 32
    $region17: #{tpu_custom_call.1} parent=1 // pred_fallthru
      _
    // Predicated region
    $region18: #{tpu_custom_call.1} parent=1 // pred_check
      _
    $region19: #{tpu_custom_call.1} parent=1 // pred_check_branch
      %62 = sbr.rel (0) target = $region21
    $region20: #{tpu_custom_call.1} parent=1 // pred_region
      %s64 = ssub.s32 64, 64
      %65 = vsyncadd [#allocation9], %s64
      %s67 = sshll.u32 [#allocation10], 4
      %s68 = int_to_ptr.vmem [resolvable:$true] %s67
      %70 = dma.hbm_to_vmem [thread:$0]  %s4, 64, %s68, [#allocation9]
    $region21: #{tpu_custom_call.1} parent=1 // pred_fallthru
      _
    // Predicated region
    $region22: #{tpu_custom_call.1} parent=1 // pred_check
      _
    $region23: #{tpu_custom_call.1} parent=1 // pred_check_branch
      %72 = sbr.rel (0) target = $region25
    $region24: #{tpu_custom_call.1} parent=1 // pred_region
      %s74 = ssub.s32 57344, 57344
      %75 = vsyncadd [#allocation12], %s74
      %s76 = sshll.u32 [#allocation11], 4
      %s77 = int_to_ptr.vmem [resolvable:$true] %s76
      %82 = dma.hbm_to_vmem [thread:$0]  %s5, 57344, %s77, [#allocation12], 896, 896, 56
    $region25: #{tpu_custom_call.1} parent=1 // pred_fallthru
      _
    // Predicated region
    $region26: #{tpu_custom_call.1} parent=1 // pred_check
      _
    $region27: #{tpu_custom_call.1} parent=1 // pred_check_branch
      %84 = sbr.rel (0) target = $region29
    $region28: #{tpu_custom_call.1} parent=1 // pred_region
      %s86 = ssub.s32 112, 112
      %87 = vsyncadd [#allocation12], %s86
      %s89 = sshll.u32 [#allocation13], 4
      %s90 = int_to_ptr.vmem [resolvable:$true] %s89
      %92 = dma.hbm_to_vmem [thread:$0]  %s6, 112, %s90, [#allocation12]
    $region29: #{tpu_custom_call.1} parent=1 // pred_fallthru
      _
    // Predicated region
    $region30: #{tpu_custom_call.1} parent=1 // pred_check
      _
    $region31: #{tpu_custom_call.1} parent=1 // pred_check_branch
      %94 = sbr.rel (0) target = $region33
    $region32: #{tpu_custom_call.1} parent=1 // pred_region
      %95 = dma.done [#allocation3], 128
    $region33: #{tpu_custom_call.1} parent=1 // pred_fallthru
      _
    // Predicated region
    $region34: #{tpu_custom_call.1} parent=1 // pred_check
      _
    $region35: #{tpu_custom_call.1} parent=1 // pred_check_branch
      %97 = sbr.rel (0) target = $region37
    $region36: #{tpu_custom_call.1} parent=1 // pred_region
      %98 = dma.done [#allocation6], 1024
    $region37: #{tpu_custom_call.1} parent=1 // pred_fallthru
      _
    // Predicated region
    $region38: #{tpu_custom_call.1} parent=1 // pred_check
      _
    $region39: #{tpu_custom_call.1} parent=1 // pred_check_branch
      %100 = sbr.rel (0) target = $region41
    $region40: #{tpu_custom_call.1} parent=1 // pred_region
      %101 = dma.done [#allocation6], 32
    $region41: #{tpu_custom_call.1} parent=1 // pred_fallthru
      _
    // Predicated region
    $region42: #{tpu_custom_call.1} parent=1 // pred_check
      _
    $region43: #{tpu_custom_call.1} parent=1 // pred_check_branch
      %103 = sbr.rel (0) target = $region45
    $region44: #{tpu_custom_call.1} parent=1 // pred_region
      %104 = dma.done [#allocation9], 16384
    $region45: #{tpu_custom_call.1} parent=1 // pred_fallthru
      _
    // Predicated region
    $region46: #{tpu_custom_call.1} parent=1 // pred_check
      _
    $region47: #{tpu_custom_call.1} parent=1 // pred_check_branch
      %106 = sbr.rel (0) target = $region49
    $region48: #{tpu_custom_call.1} parent=1 // pred_region
      %107 = dma.done [#allocation9], 64
    $region49: #{tpu_custom_call.1} parent=1 // pred_fallthru
      _
    // Predicated region
    $region50: #{tpu_custom_call.1} parent=1 // pred_check
      _
    $region51: #{tpu_custom_call.1} parent=1 // pred_check_branch
      %109 = sbr.rel (0) target = $region53
    $region52: #{tpu_custom_call.1} parent=1 // pred_region
      %110 = dma.done [#allocation12], 57344
    $region53: #{tpu_custom_call.1} parent=1 // pred_fallthru
      _
    // Predicated region
    $region54: #{tpu_custom_call.1} parent=1 // pred_check
      _
    $region55: #{tpu_custom_call.1} parent=1 // pred_check_branch
      %112 = sbr.rel (0) target = $region57
    $region56: #{tpu_custom_call.1} parent=1 // pred_region
      %113 = dma.done [#allocation12], 112
    $region57: #{tpu_custom_call.1} parent=1 // pred_fallthru
      _
    %v114 = vld [vmem:[#allocation2] sm:$0xff]
    %v115 = vld [vmem:[#allocation5] sm:$0xff]
    %v116 = vld [vmem:[#allocation5 + $0x8] sm:$0xff]
    %v117 = vld [vmem:[#allocation5 + $0x10] sm:$0xff]
    %v118 = vld [vmem:[#allocation5 + $0x18] sm:$0xff]
    %v119 = vld [vmem:[#allocation5 + $0x20] sm:$0xff]
    %v120 = vld [vmem:[#allocation5 + $0x28] sm:$0xff]
    %v121 = vld [vmem:[#allocation5 + $0x30] sm:$0xff]
    %v122 = vld [vmem:[#allocation5 + $0x38] sm:$0xff]
    %v123 = vld [vmem:[#allocation7] sm:$0x3]
    %v125 = vlaneseq
    %v126 = vshrl.u32 %v125, 7
    %v127 = vsub.s32 0, %v126
    %v128 = vrot.slane %v123, %v127
    %v129 = vlaneseq
    %v130 = vshrl.u32 %v129, 7
    %v131 = vsub.s32 1, %v130
    %v132 = vrot.slane %v123, %v131
    %vm135 = vcmask 261120
    %v137 = vsel %vm135, %v114, 0
    %139 = vmatprep.subr.mxu0 %v116
    %140 = vmatpush1.msra.mxu0 %v115
    %141 = vmatprep.subr.mxu0 %v118
    %142 = vmatpush1.msra.mxu0 %v117
    %143 = vmatprep.subr.mxu0 %v120
    %144 = vmatpush1.msra.mxu0 %v119
    %145 = vmatprep.subr.mxu0 %v122
    %146 = vmatpush1.msra.mxu0 %v121
    %147 = vmatprep.subr.mxu0 0.0
    %148 = vmatpush1.msra.mxu0 0.0
    %149 = vmatprep.subr.mxu0 0.0
    %150 = vmatpush1.msra.mxu0 0.0
    %151 = vmatprep.subr.mxu0 0.0
    %152 = vmatpush1.msra.mxu0 0.0
    %153 = vmatprep.subr.mxu0 0.0
    %154 = vmatpush1.msra.mxu0 0.0
    %155 = vmatprep.subr.mxu0 0.0
    %156 = vmatpush1.msra.mxu0 0.0
    %157 = vmatprep.subr.mxu0 0.0
    %158 = vmatpush1.msra.mxu0 0.0
    %159 = vmatprep.subr.mxu0 0.0
    %160 = vmatpush1.msra.mxu0 0.0
    %161 = vmatprep.subr.mxu0 0.0
    %162 = vmatpush1.msra.mxu0 0.0
    %163 = vmatprep.subr.mxu0 0.0
    %164 = vmatpush1.msra.mxu0 0.0
    %165 = vmatprep.subr.mxu0 0.0
    %166 = vmatpush1.msra.mxu0 0.0
    %167 = vmatprep.subr.mxu0 0.0
    %168 = vmatpush1.msra.mxu0 0.0
    %169 = vmatprep.subr.mxu0 0.0
    %170 = vmatpush1.msra.mxu0 0.0
    %171 = vmatprep.subr.mxu0 0.0
    %172 = vmatpush1.msra.mxu0 0.0
    %173 = vmatprep.subr.mxu0 0.0
    %174 = vmatpush1.msra.mxu0 0.0
    %175 = vmatprep.subr.mxu0 0.0
    %176 = vmatpush1.msra.mxu0 0.0
    %177 = vmatprep.subr.mxu0 0.0
    %178 = vmatpush1.msra.mxu0 0.0
    %179 = vmatprep.subr.mxu0 0.0
    %180 = vmatpush1.msra.mxu0 0.0
    %181 = vmatprep.subr.mxu0 0.0
    %182 = vmatpush1.msra.mxu0 0.0
    %183 = vmatprep.subr.mxu0 0.0
    %184 = vmatpush1.msra.mxu0 0.0
    %185 = vmatprep.subr.mxu0 0.0
    %186 = vmatpush1.msra.mxu0 0.0
    %187 = vmatprep.subr.mxu0 0.0
    %188 = vmatpush1.msra.mxu0 0.0
    %189 = vmatprep.subr.mxu0 0.0
    %190 = vmatpush1.msra.mxu0 0.0
    %191 = vmatprep.subr.mxu0 0.0
    %192 = vmatpush1.msra.mxu0 0.0
    %193 = vmatprep.subr.mxu0 0.0
    %194 = vmatpush1.msra.mxu0 0.0
    %195 = vmatprep.subr.mxu0 0.0
    %196 = vmatpush1.msra.mxu0 0.0
    %197 = vmatprep.subr.mxu0 0.0
    %198 = vmatpush1.msra.mxu0 0.0
    %199 = vmatprep.subr.mxu0 0.0
    %200 = vmatpush1.msra.mxu0 0.0
    %201 = vmatprep.subr.mxu0 0.0
    %202 = vmatpush1.msra.mxu0 0.0
    %203 = vmatprep.mubr.f32.mxu0 0.0
    %204 = vmatmul.mubr.f32.gmra.mrb[0].mxu0 %v137
    %v205 = vpop.f32.mrb[0].mxu0
    %v206 = vadd.f32 %v128, %v205
    %v207 = vpop.f32.mrb[0].mxu0
    %v208 = vadd.f32 %v132, %v207
    %209 = vdwg.mxu0
    %v210 = vtanh.pop %v206
    %v211 = vtanh.pop %v208
    %v212 = vld [vmem:[#allocation8] sm:$0xff]
    %v213 = vld [vmem:[#allocation8 + $0x8] sm:$0xff]
    %v214 = vld [vmem:[#allocation8 + $0x10] sm:$0xff]
    %v215 = vld [vmem:[#allocation8 + $0x18] sm:$0xff]
    %v216 = vld [vmem:[#allocation8 + $0x20] sm:$0xff]
    %v217 = vld [vmem:[#allocation8 + $0x28] sm:$0xff]
    %v218 = vld [vmem:[#allocation8 + $0x30] sm:$0xff]
    %v219 = vld [vmem:[#allocation8 + $0x38] sm:$0xff]
    %v220 = vld [vmem:[#allocation8 + $0x40] sm:$0xff]
    %v221 = vld [vmem:[#allocation8 + $0x48] sm:$0xff]
    %v222 = vld [vmem:[#allocation8 + $0x50] sm:$0xff]
    %v223 = vld [vmem:[#allocation8 + $0x58] sm:$0xff]
    %v224 = vld [vmem:[#allocation8 + $0x60] sm:$0xff]
    %v225 = vld [vmem:[#allocation8 + $0x68] sm:$0xff]
    %v226 = vld [vmem:[#allocation8 + $0x70] sm:$0xff]
    %v227 = vld [vmem:[#allocation8 + $0x78] sm:$0xff]
    %v228 = vld [vmem:[#allocation8 + $0x80] sm:$0xff]
    %v229 = vld [vmem:[#allocation8 + $0x88] sm:$0xff]
    %v230 = vld [vmem:[#allocation8 + $0x90] sm:$0xff]
    %v231 = vld [vmem:[#allocation8 + $0x98] sm:$0xff]
    %v232 = vld [vmem:[#allocation8 + $0xa0] sm:$0xff]
    %v233 = vld [vmem:[#allocation8 + $0xa8] sm:$0xff]
    %v234 = vld [vmem:[#allocation8 + $0xb0] sm:$0xff]
    %v235 = vld [vmem:[#allocation8 + $0xb8] sm:$0xff]
    %v236 = vld [vmem:[#allocation8 + $0xc0] sm:$0xff]
    %v237 = vld [vmem:[#allocation8 + $0xc8] sm:$0xff]
    %v238 = vld [vmem:[#allocation8 + $0xd0] sm:$0xff]
    %v239 = vld [vmem:[#allocation8 + $0xd8] sm:$0xff]
    %v240 = vld [vmem:[#allocation8 + $0xe0] sm:$0xff]
    %v241 = vld [vmem:[#allocation8 + $0xe8] sm:$0xff]
    %v242 = vld [vmem:[#allocation8 + $0xf0] sm:$0xff]
    %v243 = vld [vmem:[#allocation8 + $0xf8] sm:$0xff]
    %v244 = vld [vmem:[#allocation8 + $0x100] sm:$0xff]
    %v245 = vld [vmem:[#allocation8 + $0x108] sm:$0xff]
    %v246 = vld [vmem:[#allocation8 + $0x110] sm:$0xff]
    %v247 = vld [vmem:[#allocation8 + $0x118] sm:$0xff]
    %v248 = vld [vmem:[#allocation8 + $0x120] sm:$0xff]
    %v249 = vld [vmem:[#allocation8 + $0x128] sm:$0xff]
    %v250 = vld [vmem:[#allocation8 + $0x130] sm:$0xff]
    %v251 = vld [vmem:[#allocation8 + $0x138] sm:$0xff]
    %v252 = vld [vmem:[#allocation8 + $0x140] sm:$0xff]
    %v253 = vld [vmem:[#allocation8 + $0x148] sm:$0xff]
    %v254 = vld [vmem:[#allocation8 + $0x150] sm:$0xff]
    %v255 = vld [vmem:[#allocation8 + $0x158] sm:$0xff]
    %v256 = vld [vmem:[#allocation8 + $0x160] sm:$0xff]
    %v257 = vld [vmem:[#allocation8 + $0x168] sm:$0xff]
    %v258 = vld [vmem:[#allocation8 + $0x170] sm:$0xff]
    %v259 = vld [vmem:[#allocation8 + $0x178] sm:$0xff]
    %v260 = vld [vmem:[#allocation8 + $0x180] sm:$0xff]
    %v261 = vld [vmem:[#allocation8 + $0x188] sm:$0xff]
    %v262 = vld [vmem:[#allocation8 + $0x190] sm:$0xff]
    %v263 = vld [vmem:[#allocation8 + $0x198] sm:$0xff]
    %v264 = vld [vmem:[#allocation8 + $0x1a0] sm:$0xff]
    %v265 = vld [vmem:[#allocation8 + $0x1a8] sm:$0xff]
    %v266 = vld [vmem:[#allocation8 + $0x1b0] sm:$0xff]
    %v267 = vld [vmem:[#allocation8 + $0x1b8] sm:$0xff]
    %v268 = vld [vmem:[#allocation8 + $0x1c0] sm:$0xff]
    %v269 = vld [vmem:[#allocation8 + $0x1c8] sm:$0xff]
    %v270 = vld [vmem:[#allocation8 + $0x1d0] sm:$0xff]
    %v271 = vld [vmem:[#allocation8 + $0x1d8] sm:$0xff]
    %v272 = vld [vmem:[#allocation8 + $0x1e0] sm:$0xff]
    %v273 = vld [vmem:[#allocation8 + $0x1e8] sm:$0xff]
    %v274 = vld [vmem:[#allocation8 + $0x1f0] sm:$0xff]
    %v275 = vld [vmem:[#allocation8 + $0x1f8] sm:$0xff]
    %v276 = vld [vmem:[#allocation8 + $0x200] sm:$0xff]
    %v277 = vld [vmem:[#allocation8 + $0x208] sm:$0xff]
    %v278 = vld [vmem:[#allocation8 + $0x210] sm:$0xff]
    %v279 = vld [vmem:[#allocation8 + $0x218] sm:$0xff]
    %v280 = vld [vmem:[#allocation8 + $0x220] sm:$0xff]
    %v281 = vld [vmem:[#allocation8 + $0x228] sm:$0xff]
    %v282 = vld [vmem:[#allocation8 + $0x230] sm:$0xff]
    %v283 = vld [vmem:[#allocation8 + $0x238] sm:$0xff]
    %v284 = vld [vmem:[#allocation8 + $0x240] sm:$0xff]
    %v285 = vld [vmem:[#allocation8 + $0x248] sm:$0xff]
    %v286 = vld [vmem:[#allocation8 + $0x250] sm:$0xff]
    %v287 = vld [vmem:[#allocation8 + $0x258] sm:$0xff]
    %v288 = vld [vmem:[#allocation8 + $0x260] sm:$0xff]
    %v289 = vld [vmem:[#allocation8 + $0x268] sm:$0xff]
    %v290 = vld [vmem:[#allocation8 + $0x270] sm:$0xff]
    %v291 = vld [vmem:[#allocation8 + $0x278] sm:$0xff]
    %v292 = vld [vmem:[#allocation8 + $0x280] sm:$0xff]
    %v293 = vld [vmem:[#allocation8 + $0x288] sm:$0xff]
    %v294 = vld [vmem:[#allocation8 + $0x290] sm:$0xff]
    %v295 = vld [vmem:[#allocation8 + $0x298] sm:$0xff]
    %v296 = vld [vmem:[#allocation8 + $0x2a0] sm:$0xff]
    %v297 = vld [vmem:[#allocation8 + $0x2a8] sm:$0xff]
    %v298 = vld [vmem:[#allocation8 + $0x2b0] sm:$0xff]
    %v299 = vld [vmem:[#allocation8 + $0x2b8] sm:$0xff]
    %v300 = vld [vmem:[#allocation8 + $0x2c0] sm:$0xff]
    %v301 = vld [vmem:[#allocation8 + $0x2c8] sm:$0xff]
    %v302 = vld [vmem:[#allocation8 + $0x2d0] sm:$0xff]
    %v303 = vld [vmem:[#allocation8 + $0x2d8] sm:$0xff]
    %v304 = vld [vmem:[#allocation8 + $0x2e0] sm:$0xff]
    %v305 = vld [vmem:[#allocation8 + $0x2e8] sm:$0xff]
    %v306 = vld [vmem:[#allocation8 + $0x2f0] sm:$0xff]
    %v307 = vld [vmem:[#allocation8 + $0x2f8] sm:$0xff]
    %v308 = vld [vmem:[#allocation8 + $0x300] sm:$0xff]
    %v309 = vld [vmem:[#allocation8 + $0x308] sm:$0xff]
    %v310 = vld [vmem:[#allocation8 + $0x310] sm:$0xff]
    %v311 = vld [vmem:[#allocation8 + $0x318] sm:$0xff]
    %v312 = vld [vmem:[#allocation8 + $0x320] sm:$0xff]
    %v313 = vld [vmem:[#allocation8 + $0x328] sm:$0xff]
    %v314 = vld [vmem:[#allocation8 + $0x330] sm:$0xff]
    %v315 = vld [vmem:[#allocation8 + $0x338] sm:$0xff]
    %v316 = vld [vmem:[#allocation8 + $0x340] sm:$0xff]
    %v317 = vld [vmem:[#allocation8 + $0x348] sm:$0xff]
    %v318 = vld [vmem:[#allocation8 + $0x350] sm:$0xff]
    %v319 = vld [vmem:[#allocation8 + $0x358] sm:$0xff]
    %v320 = vld [vmem:[#allocation8 + $0x360] sm:$0xff]
    %v321 = vld [vmem:[#allocation8 + $0x368] sm:$0xff]
    %v322 = vld [vmem:[#allocation8 + $0x370] sm:$0xff]
    %v323 = vld [vmem:[#allocation8 + $0x378] sm:$0xff]
    %v324 = vld [vmem:[#allocation8 + $0x380] sm:$0xff]
    %v325 = vld [vmem:[#allocation8 + $0x388] sm:$0xff]
    %v326 = vld [vmem:[#allocation8 + $0x390] sm:$0xff]
    %v327 = vld [vmem:[#allocation8 + $0x398] sm:$0xff]
    %v328 = vld [vmem:[#allocation8 + $0x3a0] sm:$0xff]
    %v329 = vld [vmem:[#allocation8 + $0x3a8] sm:$0xff]
    %v330 = vld [vmem:[#allocation8 + $0x3b0] sm:$0xff]
    %v331 = vld [vmem:[#allocation8 + $0x3b8] sm:$0xff]
    %v332 = vld [vmem:[#allocation8 + $0x3c0] sm:$0xff]
    %v333 = vld [vmem:[#allocation8 + $0x3c8] sm:$0xff]
    %v334 = vld [vmem:[#allocation8 + $0x3d0] sm:$0xff]
    %v335 = vld [vmem:[#allocation8 + $0x3d8] sm:$0xff]
    %v336 = vld [vmem:[#allocation8 + $0x3e0] sm:$0xff]
    %v337 = vld [vmem:[#allocation8 + $0x3e8] sm:$0xff]
    %v338 = vld [vmem:[#allocation8 + $0x3f0] sm:$0xff]
    %v339 = vld [vmem:[#allocation8 + $0x3f8] sm:$0xff]
    %v340 = vld [vmem:[#allocation10] sm:$0xf]
    %v342 = vlaneseq
    %v343 = vshrl.u32 %v342, 7
    %v344 = vsub.s32 0, %v343
    %v345 = vrot.slane %v340, %v344
    %v346 = vlaneseq
    %v347 = vshrl.u32 %v346, 7
    %v348 = vsub.s32 1, %v347
    %v349 = vrot.slane %v340, %v348
    %v350 = vlaneseq
    %v351 = vshrl.u32 %v350, 7
    %v352 = vsub.s32 2, %v351
    %v353 = vrot.slane %v340, %v352
    %v354 = vlaneseq
    %v355 = vshrl.u32 %v354, 7
    %v356 = vsub.s32 3, %v355
    %v357 = vrot.slane %v340, %v356
    %362 = vmatprep.subr.mxu0 %v213
    %363 = vmatpush1.msra.mxu0 %v212
    %364 = vmatprep.subr.mxu0 %v217
    %365 = vmatpush1.msra.mxu0 %v216
    %366 = vmatprep.subr.mxu0 %v221
    %367 = vmatpush1.msra.mxu0 %v220
    %368 = vmatprep.subr.mxu0 %v225
    %369 = vmatpush1.msra.mxu0 %v224
    %370 = vmatprep.subr.mxu0 %v229
    %371 = vmatpush1.msra.mxu0 %v228
    %372 = vmatprep.subr.mxu0 %v233
    %373 = vmatpush1.msra.mxu0 %v232
    %374 = vmatprep.subr.mxu0 %v237
    %375 = vmatpush1.msra.mxu0 %v236
    %376 = vmatprep.subr.mxu0 %v241
    %377 = vmatpush1.msra.mxu0 %v240
    %378 = vmatprep.subr.mxu0 %v245
    %379 = vmatpush1.msra.mxu0 %v244
    %380 = vmatprep.subr.mxu0 %v249
    %381 = vmatpush1.msra.mxu0 %v248
    %382 = vmatprep.subr.mxu0 %v253
    %383 = vmatpush1.msra.mxu0 %v252
    %384 = vmatprep.subr.mxu0 %v257
    %385 = vmatpush1.msra.mxu0 %v256
    %386 = vmatprep.subr.mxu0 %v261
    %387 = vmatpush1.msra.mxu0 %v260
    %388 = vmatprep.subr.mxu0 %v265
    %389 = vmatpush1.msra.mxu0 %v264
    %390 = vmatprep.subr.mxu0 %v269
    %391 = vmatpush1.msra.mxu0 %v268
    %392 = vmatprep.subr.mxu0 %v273
    %393 = vmatpush1.msra.mxu0 %v272
    %394 = vmatprep.subr.mxu0 %v277
    %395 = vmatpush1.msra.mxu0 %v276
    %396 = vmatprep.subr.mxu0 %v281
    %397 = vmatpush1.msra.mxu0 %v280
    %398 = vmatprep.subr.mxu0 %v285
    %399 = vmatpush1.msra.mxu0 %v284
    %400 = vmatprep.subr.mxu0 %v289
    %401 = vmatpush1.msra.mxu0 %v288
    %402 = vmatprep.subr.mxu0 %v293
    %403 = vmatpush1.msra.mxu0 %v292
    %404 = vmatprep.subr.mxu0 %v297
    %405 = vmatpush1.msra.mxu0 %v296
    %406 = vmatprep.subr.mxu0 %v301
    %407 = vmatpush1.msra.mxu0 %v300
    %408 = vmatprep.subr.mxu0 %v305
    %409 = vmatpush1.msra.mxu0 %v304
    %410 = vmatprep.subr.mxu0 %v309
    %411 = vmatpush1.msra.mxu0 %v308
    %412 = vmatprep.subr.mxu0 %v313
    %413 = vmatpush1.msra.mxu0 %v312
    %414 = vmatprep.subr.mxu0 %v317
    %415 = vmatpush1.msra.mxu0 %v316
    %416 = vmatprep.subr.mxu0 %v321
    %417 = vmatpush1.msra.mxu0 %v320
    %418 = vmatprep.subr.mxu0 %v325
    %419 = vmatpush1.msra.mxu0 %v324
    %420 = vmatprep.subr.mxu0 %v329
    %421 = vmatpush1.msra.mxu0 %v328
    %422 = vmatprep.subr.mxu0 %v333
    %423 = vmatpush1.msra.mxu0 %v332
    %424 = vmatprep.subr.mxu0 %v337
    %425 = vmatpush1.msra.mxu0 %v336
    %426 = vmatprep.mubr.f32.mxu0 %v211
    %427 = vmatmul.mubr.f32.gmra.mrb[0].mxu0 %v210
    %v428 = vpop.f32.mrb[0].mxu0
    %v429 = vadd.f32 %v345, %v428
    %v430 = vpop.f32.mrb[0].mxu0
    %v431 = vadd.f32 %v349, %v430
    %432 = vdwg.mxu0
    %433 = vmatprep.subr.mxu0 %v215
    %434 = vmatpush1.msra.mxu0 %v214
    %435 = vmatprep.subr.mxu0 %v219
    %436 = vmatpush1.msra.mxu0 %v218
    %437 = vmatprep.subr.mxu0 %v223
    %438 = vmatpush1.msra.mxu0 %v222
    %439 = vmatprep.subr.mxu0 %v227
    %440 = vmatpush1.msra.mxu0 %v226
    %441 = vmatprep.subr.mxu0 %v231
    %442 = vmatpush1.msra.mxu0 %v230
    %443 = vmatprep.subr.mxu0 %v235
    %444 = vmatpush1.msra.mxu0 %v234
    %445 = vmatprep.subr.mxu0 %v239
    %446 = vmatpush1.msra.mxu0 %v238
    %447 = vmatprep.subr.mxu0 %v243
    %448 = vmatpush1.msra.mxu0 %v242
    %449 = vmatprep.subr.mxu0 %v247
    %450 = vmatpush1.msra.mxu0 %v246
    %451 = vmatprep.subr.mxu0 %v251
    %452 = vmatpush1.msra.mxu0 %v250
    %453 = vmatprep.subr.mxu0 %v255
    %454 = vmatpush1.msra.mxu0 %v254
    %455 = vmatprep.subr.mxu0 %v259
    %456 = vmatpush1.msra.mxu0 %v258
    %457 = vmatprep.subr.mxu0 %v263
    %458 = vmatpush1.msra.mxu0 %v262
    %459 = vmatprep.subr.mxu0 %v267
    %460 = vmatpush1.msra.mxu0 %v266
    %461 = vmatprep.subr.mxu0 %v271
    %462 = vmatpush1.msra.mxu0 %v270
    %463 = vmatprep.subr.mxu0 %v275
    %464 = vmatpush1.msra.mxu0 %v274
    %465 = vmatprep.subr.mxu0 %v279
    %466 = vmatpush1.msra.mxu0 %v278
    %467 = vmatprep.subr.mxu0 %v283
    %468 = vmatpush1.msra.mxu0 %v282
    %469 = vmatprep.subr.mxu0 %v287
    %470 = vmatpush1.msra.mxu0 %v286
    %471 = vmatprep.subr.mxu0 %v291
    %472 = vmatpush1.msra.mxu0 %v290
    %473 = vmatprep.subr.mxu0 %v295
    %474 = vmatpush1.msra.mxu0 %v294
    %475 = vmatprep.subr.mxu0 %v299
    %476 = vmatpush1.msra.mxu0 %v298
    %477 = vmatprep.subr.mxu0 %v303
    %478 = vmatpush1.msra.mxu0 %v302
    %479 = vmatprep.subr.mxu0 %v307
    %480 = vmatpush1.msra.mxu0 %v306
    %481 = vmatprep.subr.mxu0 %v311
    %482 = vmatpush1.msra.mxu0 %v310
    %483 = vmatprep.subr.mxu0 %v315
    %484 = vmatpush1.msra.mxu0 %v314
    %485 = vmatprep.subr.mxu0 %v319
    %486 = vmatpush1.msra.mxu0 %v318
    %487 = vmatprep.subr.mxu0 %v323
    %488 = vmatpush1.msra.mxu0 %v322
    %489 = vmatprep.subr.mxu0 %v327
    %490 = vmatpush1.msra.mxu0 %v326
    %491 = vmatprep.subr.mxu0 %v331
    %492 = vmatpush1.msra.mxu0 %v330
    %493 = vmatprep.subr.mxu0 %v335
    %494 = vmatpush1.msra.mxu0 %v334
    %495 = vmatprep.subr.mxu0 %v339
    %496 = vmatpush1.msra.mxu0 %v338
    %497 = vmatprep.mubr.f32.mxu0 %v211
    %498 = vmatmul.mubr.f32.gmra.mrb[0].mxu0 %v210
    %v499 = vpop.f32.mrb[0].mxu0
    %v500 = vadd.f32 %v353, %v499
    %v501 = vpop.f32.mrb[0].mxu0
    %v502 = vadd.f32 %v357, %v501
    %503 = vdwg.mxu0
    %v504 = vtanh.pop %v429
    %v505 = vtanh.pop %v431
    %v506 = vtanh.pop %v500
    %v507 = vtanh.pop %v502
    %v508 = vld [vmem:[#allocation11] sm:$0xff]
    %v509 = vld [vmem:[#allocation11 + $0x8] sm:$0xff]
    %v510 = vld [vmem:[#allocation11 + $0x10] sm:$0xff]
    %v511 = vld [vmem:[#allocation11 + $0x18] sm:$0xff]
    %v512 = vld [vmem:[#allocation11 + $0x20] sm:$0xff]
    %v513 = vld [vmem:[#allocation11 + $0x28] sm:$0xff]
    %v514 = vld [vmem:[#allocation11 + $0x30] sm:$0xff]
    %v515 = vld [vmem:[#allocation11 + $0x38] sm:$0xff]
    %v516 = vld [vmem:[#allocation11 + $0x40] sm:$0xff]
    %v517 = vld [vmem:[#allocation11 + $0x48] sm:$0xff]
    %v518 = vld [vmem:[#allocation11 + $0x50] sm:$0xff]
    %v519 = vld [vmem:[#allocation11 + $0x58] sm:$0xff]
    %v520 = vld [vmem:[#allocation11 + $0x60] sm:$0xff]
    %v521 = vld [vmem:[#allocation11 + $0x68] sm:$0xff]
    %v522 = vld [vmem:[#allocation11 + $0x70] sm:$0xff]
    %v523 = vld [vmem:[#allocation11 + $0x78] sm:$0xff]
    %v524 = vld [vmem:[#allocation11 + $0x80] sm:$0xff]
    %v525 = vld [vmem:[#allocation11 + $0x88] sm:$0xff]
    %v526 = vld [vmem:[#allocation11 + $0x90] sm:$0xff]
    %v527 = vld [vmem:[#allocation11 + $0x98] sm:$0xff]
    %v528 = vld [vmem:[#allocation11 + $0xa0] sm:$0xff]
    %v529 = vld [vmem:[#allocation11 + $0xa8] sm:$0xff]
    %v530 = vld [vmem:[#allocation11 + $0xb0] sm:$0xff]
    %v531 = vld [vmem:[#allocation11 + $0xb8] sm:$0xff]
    %v532 = vld [vmem:[#allocation11 + $0xc0] sm:$0xff]
    %v533 = vld [vmem:[#allocation11 + $0xc8] sm:$0xff]
    %v534 = vld [vmem:[#allocation11 + $0xd0] sm:$0xff]
    %v535 = vld [vmem:[#allocation11 + $0xd8] sm:$0xff]
    %v536 = vld [vmem:[#allocation11 + $0xe0] sm:$0xff]
    %v537 = vld [vmem:[#allocation11 + $0xe8] sm:$0xff]
    %v538 = vld [vmem:[#allocation11 + $0xf0] sm:$0xff]
    %v539 = vld [vmem:[#allocation11 + $0xf8] sm:$0xff]
    %v540 = vld [vmem:[#allocation11 + $0x100] sm:$0xff]
    %v541 = vld [vmem:[#allocation11 + $0x108] sm:$0xff]
    %v542 = vld [vmem:[#allocation11 + $0x110] sm:$0xff]
    %v543 = vld [vmem:[#allocation11 + $0x118] sm:$0xff]
    %v544 = vld [vmem:[#allocation11 + $0x120] sm:$0xff]
    %v545 = vld [vmem:[#allocation11 + $0x128] sm:$0xff]
    %v546 = vld [vmem:[#allocation11 + $0x130] sm:$0xff]
    %v547 = vld [vmem:[#allocation11 + $0x138] sm:$0xff]
    %v548 = vld [vmem:[#allocation11 + $0x140] sm:$0xff]
    %v549 = vld [vmem:[#allocation11 + $0x148] sm:$0xff]
    %v550 = vld [vmem:[#allocation11 + $0x150] sm:$0xff]
    %v551 = vld [vmem:[#allocation11 + $0x158] sm:$0xff]
    %v552 = vld [vmem:[#allocation11 + $0x160] sm:$0xff]
    %v553 = vld [vmem:[#allocation11 + $0x168] sm:$0xff]
    %v554 = vld [vmem:[#allocation11 + $0x170] sm:$0xff]
    %v555 = vld [vmem:[#allocation11 + $0x178] sm:$0xff]
    %v556 = vld [vmem:[#allocation11 + $0x180] sm:$0xff]
    %v557 = vld [vmem:[#allocation11 + $0x188] sm:$0xff]
    %v558 = vld [vmem:[#allocation11 + $0x190] sm:$0xff]
    %v559 = vld [vmem:[#allocation11 + $0x198] sm:$0xff]
    %v560 = vld [vmem:[#allocation11 + $0x1a0] sm:$0xff]
    %v561 = vld [vmem:[#allocation11 + $0x1a8] sm:$0xff]
    %v562 = vld [vmem:[#allocation11 + $0x1b0] sm:$0xff]
    %v563 = vld [vmem:[#allocation11 + $0x1b8] sm:$0xff]
    %v564 = vld [vmem:[#allocation11 + $0x1c0] sm:$0xff]
    %v565 = vld [vmem:[#allocation11 + $0x1c8] sm:$0xff]
    %v566 = vld [vmem:[#allocation11 + $0x1d0] sm:$0xff]
    %v567 = vld [vmem:[#allocation11 + $0x1d8] sm:$0xff]
    %v568 = vld [vmem:[#allocation11 + $0x1e0] sm:$0xff]
    %v569 = vld [vmem:[#allocation11 + $0x1e8] sm:$0xff]
    %v570 = vld [vmem:[#allocation11 + $0x1f0] sm:$0xff]
    %v571 = vld [vmem:[#allocation11 + $0x1f8] sm:$0xff]
    %v572 = vld [vmem:[#allocation11 + $0x200] sm:$0xff]
    %v573 = vld [vmem:[#allocation11 + $0x208] sm:$0xff]
    %v574 = vld [vmem:[#allocation11 + $0x210] sm:$0xff]
    %v575 = vld [vmem:[#allocation11 + $0x218] sm:$0xff]
    %v576 = vld [vmem:[#allocation11 + $0x220] sm:$0xff]
    %v577 = vld [vmem:[#allocation11 + $0x228] sm:$0xff]
    %v578 = vld [vmem:[#allocation11 + $0x230] sm:$0xff]
    %v579 = vld [vmem:[#allocation11 + $0x238] sm:$0xff]
    %v580 = vld [vmem:[#allocation11 + $0x240] sm:$0xff]
    %v581 = vld [vmem:[#allocation11 + $0x248] sm:$0xff]
    %v582 = vld [vmem:[#allocation11 + $0x250] sm:$0xff]
    %v583 = vld [vmem:[#allocation11 + $0x258] sm:$0xff]
    %v584 = vld [vmem:[#allocation11 + $0x260] sm:$0xff]
    %v585 = vld [vmem:[#allocation11 + $0x268] sm:$0xff]
    %v586 = vld [vmem:[#allocation11 + $0x270] sm:$0xff]
    %v587 = vld [vmem:[#allocation11 + $0x278] sm:$0xff]
    %v588 = vld [vmem:[#allocation11 + $0x280] sm:$0xff]
    %v589 = vld [vmem:[#allocation11 + $0x288] sm:$0xff]
    %v590 = vld [vmem:[#allocation11 + $0x290] sm:$0xff]
    %v591 = vld [vmem:[#allocation11 + $0x298] sm:$0xff]
    %v592 = vld [vmem:[#allocation11 + $0x2a0] sm:$0xff]
    %v593 = vld [vmem:[#allocation11 + $0x2a8] sm:$0xff]
    %v594 = vld [vmem:[#allocation11 + $0x2b0] sm:$0xff]
    %v595 = vld [vmem:[#allocation11 + $0x2b8] sm:$0xff]
    %v596 = vld [vmem:[#allocation11 + $0x2c0] sm:$0xff]
    %v597 = vld [vmem:[#allocation11 + $0x2c8] sm:$0xff]
    %v598 = vld [vmem:[#allocation11 + $0x2d0] sm:$0xff]
    %v599 = vld [vmem:[#allocation11 + $0x2d8] sm:$0xff]
    %v600 = vld [vmem:[#allocation11 + $0x2e0] sm:$0xff]
    %v601 = vld [vmem:[#allocation11 + $0x2e8] sm:$0xff]
    %v602 = vld [vmem:[#allocation11 + $0x2f0] sm:$0xff]
    %v603 = vld [vmem:[#allocation11 + $0x2f8] sm:$0xff]
    %v604 = vld [vmem:[#allocation11 + $0x300] sm:$0xff]
    %v605 = vld [vmem:[#allocation11 + $0x308] sm:$0xff]
    %v606 = vld [vmem:[#allocation11 + $0x310] sm:$0xff]
    %v607 = vld [vmem:[#allocation11 + $0x318] sm:$0xff]
    %v608 = vld [vmem:[#allocation11 + $0x320] sm:$0xff]
    %v609 = vld [vmem:[#allocation11 + $0x328] sm:$0xff]
    %v610 = vld [vmem:[#allocation11 + $0x330] sm:$0xff]
    %v611 = vld [vmem:[#allocation11 + $0x338] sm:$0xff]
    %v612 = vld [vmem:[#allocation11 + $0x340] sm:$0xff]
    %v613 = vld [vmem:[#allocation11 + $0x348] sm:$0xff]
    %v614 = vld [vmem:[#allocation11 + $0x350] sm:$0xff]
    %v615 = vld [vmem:[#allocation11 + $0x358] sm:$0xff]
    %v616 = vld [vmem:[#allocation11 + $0x360] sm:$0xff]
    %v617 = vld [vmem:[#allocation11 + $0x368] sm:$0xff]
    %v618 = vld [vmem:[#allocation11 + $0x370] sm:$0xff]
    %v619 = vld [vmem:[#allocation11 + $0x378] sm:$0xff]
    %v620 = vld [vmem:[#allocation11 + $0x380] sm:$0xff]
    %v621 = vld [vmem:[#allocation11 + $0x388] sm:$0xff]
    %v622 = vld [vmem:[#allocation11 + $0x390] sm:$0xff]
    %v623 = vld [vmem:[#allocation11 + $0x398] sm:$0xff]
    %v624 = vld [vmem:[#allocation11 + $0x3a0] sm:$0xff]
    %v625 = vld [vmem:[#allocation11 + $0x3a8] sm:$0xff]
    %v626 = vld [vmem:[#allocation11 + $0x3b0] sm:$0xff]
    %v627 = vld [vmem:[#allocation11 + $0x3b8] sm:$0xff]
    %v628 = vld [vmem:[#allocation11 + $0x3c0] sm:$0xff]
    %v629 = vld [vmem:[#allocation11 + $0x3c8] sm:$0xff]
    %v630 = vld [vmem:[#allocation11 + $0x3d0] sm:$0xff]
    %v631 = vld [vmem:[#allocation11 + $0x3d8] sm:$0xff]
    %v632 = vld [vmem:[#allocation11 + $0x3e0] sm:$0xff]
    %v633 = vld [vmem:[#allocation11 + $0x3e8] sm:$0xff]
    %v634 = vld [vmem:[#allocation11 + $0x3f0] sm:$0xff]
    %v635 = vld [vmem:[#allocation11 + $0x3f8] sm:$0xff]
    %v636 = vld [vmem:[#allocation11 + $0x400] sm:$0xff]
    %v637 = vld [vmem:[#allocation11 + $0x408] sm:$0xff]
    %v638 = vld [vmem:[#allocation11 + $0x410] sm:$0xff]
    %v639 = vld [vmem:[#allocation11 + $0x418] sm:$0xff]
    %v640 = vld [vmem:[#allocation11 + $0x420] sm:$0xff]
    %v641 = vld [vmem:[#allocation11 + $0x428] sm:$0xff]
    %v642 = vld [vmem:[#allocation11 + $0x430] sm:$0xff]
    %v643 = vld [vmem:[#allocation11 + $0x438] sm:$0xff]
    %v644 = vld [vmem:[#allocation11 + $0x440] sm:$0xff]
    %v645 = vld [vmem:[#allocation11 + $0x448] sm:$0xff]
    %v646 = vld [vmem:[#allocation11 + $0x450] sm:$0xff]
    %v647 = vld [vmem:[#allocation11 + $0x458] sm:$0xff]
    %v648 = vld [vmem:[#allocation11 + $0x460] sm:$0xff]
    %v649 = vld [vmem:[#allocation11 + $0x468] sm:$0xff]
    %v650 = vld [vmem:[#allocation11 + $0x470] sm:$0xff]
    %v651 = vld [vmem:[#allocation11 + $0x478] sm:$0xff]
    %v652 = vld [vmem:[#allocation11 + $0x480] sm:$0xff]
    %v653 = vld [vmem:[#allocation11 + $0x488] sm:$0xff]
    %v654 = vld [vmem:[#allocation11 + $0x490] sm:$0xff]
    %v655 = vld [vmem:[#allocation11 + $0x498] sm:$0xff]
    %v656 = vld [vmem:[#allocation11 + $0x4a0] sm:$0xff]
    %v657 = vld [vmem:[#allocation11 + $0x4a8] sm:$0xff]
    %v658 = vld [vmem:[#allocation11 + $0x4b0] sm:$0xff]
    %v659 = vld [vmem:[#allocation11 + $0x4b8] sm:$0xff]
    %v660 = vld [vmem:[#allocation11 + $0x4c0] sm:$0xff]
    %v661 = vld [vmem:[#allocation11 + $0x4c8] sm:$0xff]
    %v662 = vld [vmem:[#allocation11 + $0x4d0] sm:$0xff]
    %v663 = vld [vmem:[#allocation11 + $0x4d8] sm:$0xff]
    %v664 = vld [vmem:[#allocation11 + $0x4e0] sm:$0xff]
    %v665 = vld [vmem:[#allocation11 + $0x4e8] sm:$0xff]
    %v666 = vld [vmem:[#allocation11 + $0x4f0] sm:$0xff]
    %v667 = vld [vmem:[#allocation11 + $0x4f8] sm:$0xff]
    %v668 = vld [vmem:[#allocation11 + $0x500] sm:$0xff]
    %v669 = vld [vmem:[#allocation11 + $0x508] sm:$0xff]
    %v670 = vld [vmem:[#allocation11 + $0x510] sm:$0xff]
    %v671 = vld [vmem:[#allocation11 + $0x518] sm:$0xff]
    %v672 = vld [vmem:[#allocation11 + $0x520] sm:$0xff]
    %v673 = vld [vmem:[#allocation11 + $0x528] sm:$0xff]
    %v674 = vld [vmem:[#allocation11 + $0x530] sm:$0xff]
    %v675 = vld [vmem:[#allocation11 + $0x538] sm:$0xff]
    %v676 = vld [vmem:[#allocation11 + $0x540] sm:$0xff]
    %v677 = vld [vmem:[#allocation11 + $0x548] sm:$0xff]
    %v678 = vld [vmem:[#allocation11 + $0x550] sm:$0xff]
    %v679 = vld [vmem:[#allocation11 + $0x558] sm:$0xff]
    %v680 = vld [vmem:[#allocation11 + $0x560] sm:$0xff]
    %v681 = vld [vmem:[#allocation11 + $0x568] sm:$0xff]
    %v682 = vld [vmem:[#allocation11 + $0x570] sm:$0xff]
    %v683 = vld [vmem:[#allocation11 + $0x578] sm:$0xff]
    %v684 = vld [vmem:[#allocation11 + $0x580] sm:$0xff]
    %v685 = vld [vmem:[#allocation11 + $0x588] sm:$0xff]
    %v686 = vld [vmem:[#allocation11 + $0x590] sm:$0xff]
    %v687 = vld [vmem:[#allocation11 + $0x598] sm:$0xff]
    %v688 = vld [vmem:[#allocation11 + $0x5a0] sm:$0xff]
    %v689 = vld [vmem:[#allocation11 + $0x5a8] sm:$0xff]
    %v690 = vld [vmem:[#allocation11 + $0x5b0] sm:$0xff]
    %v691 = vld [vmem:[#allocation11 + $0x5b8] sm:$0xff]
    %v692 = vld [vmem:[#allocation11 + $0x5c0] sm:$0xff]
    %v693 = vld [vmem:[#allocation11 + $0x5c8] sm:$0xff]
    %v694 = vld [vmem:[#allocation11 + $0x5d0] sm:$0xff]
    %v695 = vld [vmem:[#allocation11 + $0x5d8] sm:$0xff]
    %v696 = vld [vmem:[#allocation11 + $0x5e0] sm:$0xff]
    %v697 = vld [vmem:[#allocation11 + $0x5e8] sm:$0xff]
    %v698 = vld [vmem:[#allocation11 + $0x5f0] sm:$0xff]
    %v699 = vld [vmem:[#allocation11 + $0x5f8] sm:$0xff]
    %v700 = vld [vmem:[#allocation11 + $0x600] sm:$0xff]
    %v701 = vld [vmem:[#allocation11 + $0x608] sm:$0xff]
    %v702 = vld [vmem:[#allocation11 + $0x610] sm:$0xff]
    %v703 = vld [vmem:[#allocation11 + $0x618] sm:$0xff]
    %v704 = vld [vmem:[#allocation11 + $0x620] sm:$0xff]
    %v705 = vld [vmem:[#allocation11 + $0x628] sm:$0xff]
    %v706 = vld [vmem:[#allocation11 + $0x630] sm:$0xff]
    %v707 = vld [vmem:[#allocation11 + $0x638] sm:$0xff]
    %v708 = vld [vmem:[#allocation11 + $0x640] sm:$0xff]
    %v709 = vld [vmem:[#allocation11 + $0x648] sm:$0xff]
    %v710 = vld [vmem:[#allocation11 + $0x650] sm:$0xff]
    %v711 = vld [vmem:[#allocation11 + $0x658] sm:$0xff]
    %v712 = vld [vmem:[#allocation11 + $0x660] sm:$0xff]
    %v713 = vld [vmem:[#allocation11 + $0x668] sm:$0xff]
    %v714 = vld [vmem:[#allocation11 + $0x670] sm:$0xff]
    %v715 = vld [vmem:[#allocation11 + $0x678] sm:$0xff]
    %v716 = vld [vmem:[#allocation11 + $0x680] sm:$0xff]
    %v717 = vld [vmem:[#allocation11 + $0x688] sm:$0xff]
    %v718 = vld [vmem:[#allocation11 + $0x690] sm:$0xff]
    %v719 = vld [vmem:[#allocation11 + $0x698] sm:$0xff]
    %v720 = vld [vmem:[#allocation11 + $0x6a0] sm:$0xff]
    %v721 = vld [vmem:[#allocation11 + $0x6a8] sm:$0xff]
    %v722 = vld [vmem:[#allocation11 + $0x6b0] sm:$0xff]
    %v723 = vld [vmem:[#allocation11 + $0x6b8] sm:$0xff]
    %v724 = vld [vmem:[#allocation11 + $0x6c0] sm:$0xff]
    %v725 = vld [vmem:[#allocation11 + $0x6c8] sm:$0xff]
    %v726 = vld [vmem:[#allocation11 + $0x6d0] sm:$0xff]
    %v727 = vld [vmem:[#allocation11 + $0x6d8] sm:$0xff]
    %v728 = vld [vmem:[#allocation11 + $0x6e0] sm:$0xff]
    %v729 = vld [vmem:[#allocation11 + $0x6e8] sm:$0xff]
    %v730 = vld [vmem:[#allocation11 + $0x6f0] sm:$0xff]
    %v731 = vld [vmem:[#allocation11 + $0x6f8] sm:$0xff]
    %v732 = vld [vmem:[#allocation11 + $0x700] sm:$0xff]
    %v733 = vld [vmem:[#allocation11 + $0x708] sm:$0xff]
    %v734 = vld [vmem:[#allocation11 + $0x710] sm:$0xff]
    %v735 = vld [vmem:[#allocation11 + $0x718] sm:$0xff]
    %v736 = vld [vmem:[#allocation11 + $0x720] sm:$0xff]
    %v737 = vld [vmem:[#allocation11 + $0x728] sm:$0xff]
    %v738 = vld [vmem:[#allocation11 + $0x730] sm:$0xff]
    %v739 = vld [vmem:[#allocation11 + $0x738] sm:$0xff]
    %v740 = vld [vmem:[#allocation11 + $0x740] sm:$0xff]
    %v741 = vld [vmem:[#allocation11 + $0x748] sm:$0xff]
    %v742 = vld [vmem:[#allocation11 + $0x750] sm:$0xff]
    %v743 = vld [vmem:[#allocation11 + $0x758] sm:$0xff]
    %v744 = vld [vmem:[#allocation11 + $0x760] sm:$0xff]
    %v745 = vld [vmem:[#allocation11 + $0x768] sm:$0xff]
    %v746 = vld [vmem:[#allocation11 + $0x770] sm:$0xff]
    %v747 = vld [vmem:[#allocation11 + $0x778] sm:$0xff]
    %v748 = vld [vmem:[#allocation11 + $0x780] sm:$0xff]
    %v749 = vld [vmem:[#allocation11 + $0x788] sm:$0xff]
    %v750 = vld [vmem:[#allocation11 + $0x790] sm:$0xff]
    %v751 = vld [vmem:[#allocation11 + $0x798] sm:$0xff]
    %v752 = vld [vmem:[#allocation11 + $0x7a0] sm:$0xff]
    %v753 = vld [vmem:[#allocation11 + $0x7a8] sm:$0xff]
    %v754 = vld [vmem:[#allocation11 + $0x7b0] sm:$0xff]
    %v755 = vld [vmem:[#allocation11 + $0x7b8] sm:$0xff]
    %v756 = vld [vmem:[#allocation11 + $0x7c0] sm:$0xff]
    %v757 = vld [vmem:[#allocation11 + $0x7c8] sm:$0xff]
    %v758 = vld [vmem:[#allocation11 + $0x7d0] sm:$0xff]
    %v759 = vld [vmem:[#allocation11 + $0x7d8] sm:$0xff]
    %v760 = vld [vmem:[#allocation11 + $0x7e0] sm:$0xff]
    %v761 = vld [vmem:[#allocation11 + $0x7e8] sm:$0xff]
    %v762 = vld [vmem:[#allocation11 + $0x7f0] sm:$0xff]
    %v763 = vld [vmem:[#allocation11 + $0x7f8] sm:$0xff]
    %v764 = vld [vmem:[#allocation11 + $0x800] sm:$0xff]
    %v765 = vld [vmem:[#allocation11 + $0x808] sm:$0xff]
    %v766 = vld [vmem:[#allocation11 + $0x810] sm:$0xff]
    %v767 = vld [vmem:[#allocation11 + $0x818] sm:$0xff]
    %v768 = vld [vmem:[#allocation11 + $0x820] sm:$0xff]
    %v769 = vld [vmem:[#allocation11 + $0x828] sm:$0xff]
    %v770 = vld [vmem:[#allocation11 + $0x830] sm:$0xff]
    %v771 = vld [vmem:[#allocation11 + $0x838] sm:$0xff]
    %v772 = vld [vmem:[#allocation11 + $0x840] sm:$0xff]
    %v773 = vld [vmem:[#allocation11 + $0x848] sm:$0xff]
    %v774 = vld [vmem:[#allocation11 + $0x850] sm:$0xff]
    %v775 = vld [vmem:[#allocation11 + $0x858] sm:$0xff]
    %v776 = vld [vmem:[#allocation11 + $0x860] sm:$0xff]
    %v777 = vld [vmem:[#allocation11 + $0x868] sm:$0xff]
    %v778 = vld [vmem:[#allocation11 + $0x870] sm:$0xff]
    %v779 = vld [vmem:[#allocation11 + $0x878] sm:$0xff]
    %v780 = vld [vmem:[#allocation11 + $0x880] sm:$0xff]
    %v781 = vld [vmem:[#allocation11 + $0x888] sm:$0xff]
    %v782 = vld [vmem:[#allocation11 + $0x890] sm:$0xff]
    %v783 = vld [vmem:[#allocation11 + $0x898] sm:$0xff]
    %v784 = vld [vmem:[#allocation11 + $0x8a0] sm:$0xff]
    %v785 = vld [vmem:[#allocation11 + $0x8a8] sm:$0xff]
    %v786 = vld [vmem:[#allocation11 + $0x8b0] sm:$0xff]
    %v787 = vld [vmem:[#allocation11 + $0x8b8] sm:$0xff]
    %v788 = vld [vmem:[#allocation11 + $0x8c0] sm:$0xff]
    %v789 = vld [vmem:[#allocation11 + $0x8c8] sm:$0xff]
    %v790 = vld [vmem:[#allocation11 + $0x8d0] sm:$0xff]
    %v791 = vld [vmem:[#allocation11 + $0x8d8] sm:$0xff]
    %v792 = vld [vmem:[#allocation11 + $0x8e0] sm:$0xff]
    %v793 = vld [vmem:[#allocation11 + $0x8e8] sm:$0xff]
    %v794 = vld [vmem:[#allocation11 + $0x8f0] sm:$0xff]
    %v795 = vld [vmem:[#allocation11 + $0x8f8] sm:$0xff]
    %v796 = vld [vmem:[#allocation11 + $0x900] sm:$0xff]
    %v797 = vld [vmem:[#allocation11 + $0x908] sm:$0xff]
    %v798 = vld [vmem:[#allocation11 + $0x910] sm:$0xff]
    %v799 = vld [vmem:[#allocation11 + $0x918] sm:$0xff]
    %v800 = vld [vmem:[#allocation11 + $0x920] sm:$0xff]
    %v801 = vld [vmem:[#allocation11 + $0x928] sm:$0xff]
    %v802 = vld [vmem:[#allocation11 + $0x930] sm:$0xff]
    %v803 = vld [vmem:[#allocation11 + $0x938] sm:$0xff]
    %v804 = vld [vmem:[#allocation11 + $0x940] sm:$0xff]
    %v805 = vld [vmem:[#allocation11 + $0x948] sm:$0xff]
    %v806 = vld [vmem:[#allocation11 + $0x950] sm:$0xff]
    %v807 = vld [vmem:[#allocation11 + $0x958] sm:$0xff]
    %v808 = vld [vmem:[#allocation11 + $0x960] sm:$0xff]
    %v809 = vld [vmem:[#allocation11 + $0x968] sm:$0xff]
    %v810 = vld [vmem:[#allocation11 + $0x970] sm:$0xff]
    %v811 = vld [vmem:[#allocation11 + $0x978] sm:$0xff]
    %v812 = vld [vmem:[#allocation11 + $0x980] sm:$0xff]
    %v813 = vld [vmem:[#allocation11 + $0x988] sm:$0xff]
    %v814 = vld [vmem:[#allocation11 + $0x990] sm:$0xff]
    %v815 = vld [vmem:[#allocation11 + $0x998] sm:$0xff]
    %v816 = vld [vmem:[#allocation11 + $0x9a0] sm:$0xff]
    %v817 = vld [vmem:[#allocation11 + $0x9a8] sm:$0xff]
    %v818 = vld [vmem:[#allocation11 + $0x9b0] sm:$0xff]
    %v819 = vld [vmem:[#allocation11 + $0x9b8] sm:$0xff]
    %v820 = vld [vmem:[#allocation11 + $0x9c0] sm:$0xff]
    %v821 = vld [vmem:[#allocation11 + $0x9c8] sm:$0xff]
    %v822 = vld [vmem:[#allocation11 + $0x9d0] sm:$0xff]
    %v823 = vld [vmem:[#allocation11 + $0x9d8] sm:$0xff]
    %v824 = vld [vmem:[#allocation11 + $0x9e0] sm:$0xff]
    %v825 = vld [vmem:[#allocation11 + $0x9e8] sm:$0xff]
    %v826 = vld [vmem:[#allocation11 + $0x9f0] sm:$0xff]
    %v827 = vld [vmem:[#allocation11 + $0x9f8] sm:$0xff]
    %v828 = vld [vmem:[#allocation11 + $0xa00] sm:$0xff]
    %v829 = vld [vmem:[#allocation11 + $0xa08] sm:$0xff]
    %v830 = vld [vmem:[#allocation11 + $0xa10] sm:$0xff]
    %v831 = vld [vmem:[#allocation11 + $0xa18] sm:$0xff]
    %v832 = vld [vmem:[#allocation11 + $0xa20] sm:$0xff]
    %v833 = vld [vmem:[#allocation11 + $0xa28] sm:$0xff]
    %v834 = vld [vmem:[#allocation11 + $0xa30] sm:$0xff]
    %v835 = vld [vmem:[#allocation11 + $0xa38] sm:$0xff]
    %v836 = vld [vmem:[#allocation11 + $0xa40] sm:$0xff]
    %v837 = vld [vmem:[#allocation11 + $0xa48] sm:$0xff]
    %v838 = vld [vmem:[#allocation11 + $0xa50] sm:$0xff]
    %v839 = vld [vmem:[#allocation11 + $0xa58] sm:$0xff]
    %v840 = vld [vmem:[#allocation11 + $0xa60] sm:$0xff]
    %v841 = vld [vmem:[#allocation11 + $0xa68] sm:$0xff]
    %v842 = vld [vmem:[#allocation11 + $0xa70] sm:$0xff]
    %v843 = vld [vmem:[#allocation11 + $0xa78] sm:$0xff]
    %v844 = vld [vmem:[#allocation11 + $0xa80] sm:$0xff]
    %v845 = vld [vmem:[#allocation11 + $0xa88] sm:$0xff]
    %v846 = vld [vmem:[#allocation11 + $0xa90] sm:$0xff]
    %v847 = vld [vmem:[#allocation11 + $0xa98] sm:$0xff]
    %v848 = vld [vmem:[#allocation11 + $0xaa0] sm:$0xff]
    %v849 = vld [vmem:[#allocation11 + $0xaa8] sm:$0xff]
    %v850 = vld [vmem:[#allocation11 + $0xab0] sm:$0xff]
    %v851 = vld [vmem:[#allocation11 + $0xab8] sm:$0xff]
    %v852 = vld [vmem:[#allocation11 + $0xac0] sm:$0xff]
    %v853 = vld [vmem:[#allocation11 + $0xac8] sm:$0xff]
    %v854 = vld [vmem:[#allocation11 + $0xad0] sm:$0xff]
    %v855 = vld [vmem:[#allocation11 + $0xad8] sm:$0xff]
    %v856 = vld [vmem:[#allocation11 + $0xae0] sm:$0xff]
    %v857 = vld [vmem:[#allocation11 + $0xae8] sm:$0xff]
    %v858 = vld [vmem:[#allocation11 + $0xaf0] sm:$0xff]
    %v859 = vld [vmem:[#allocation11 + $0xaf8] sm:$0xff]
    %v860 = vld [vmem:[#allocation11 + $0xb00] sm:$0xff]
    %v861 = vld [vmem:[#allocation11 + $0xb08] sm:$0xff]
    %v862 = vld [vmem:[#allocation11 + $0xb10] sm:$0xff]
    %v863 = vld [vmem:[#allocation11 + $0xb18] sm:$0xff]
    %v864 = vld [vmem:[#allocation11 + $0xb20] sm:$0xff]
    %v865 = vld [vmem:[#allocation11 + $0xb28] sm:$0xff]
    %v866 = vld [vmem:[#allocation11 + $0xb30] sm:$0xff]
    %v867 = vld [vmem:[#allocation11 + $0xb38] sm:$0xff]
    %v868 = vld [vmem:[#allocation11 + $0xb40] sm:$0xff]
    %v869 = vld [vmem:[#allocation11 + $0xb48] sm:$0xff]
    %v870 = vld [vmem:[#allocation11 + $0xb50] sm:$0xff]
    %v871 = vld [vmem:[#allocation11 + $0xb58] sm:$0xff]
    %v872 = vld [vmem:[#allocation11 + $0xb60] sm:$0xff]
    %v873 = vld [vmem:[#allocation11 + $0xb68] sm:$0xff]
    %v874 = vld [vmem:[#allocation11 + $0xb70] sm:$0xff]
    %v875 = vld [vmem:[#allocation11 + $0xb78] sm:$0xff]
    %v876 = vld [vmem:[#allocation11 + $0xb80] sm:$0xff]
    %v877 = vld [vmem:[#allocation11 + $0xb88] sm:$0xff]
    %v878 = vld [vmem:[#allocation11 + $0xb90] sm:$0xff]
    %v879 = vld [vmem:[#allocation11 + $0xb98] sm:$0xff]
    %v880 = vld [vmem:[#allocation11 + $0xba0] sm:$0xff]
    %v881 = vld [vmem:[#allocation11 + $0xba8] sm:$0xff]
    %v882 = vld [vmem:[#allocation11 + $0xbb0] sm:$0xff]
    %v883 = vld [vmem:[#allocation11 + $0xbb8] sm:$0xff]
    %v884 = vld [vmem:[#allocation11 + $0xbc0] sm:$0xff]
    %v885 = vld [vmem:[#allocation11 + $0xbc8] sm:$0xff]
    %v886 = vld [vmem:[#allocation11 + $0xbd0] sm:$0xff]
    %v887 = vld [vmem:[#allocation11 + $0xbd8] sm:$0xff]
    %v888 = vld [vmem:[#allocation11 + $0xbe0] sm:$0xff]
    %v889 = vld [vmem:[#allocation11 + $0xbe8] sm:$0xff]
    %v890 = vld [vmem:[#allocation11 + $0xbf0] sm:$0xff]
    %v891 = vld [vmem:[#allocation11 + $0xbf8] sm:$0xff]
    %v892 = vld [vmem:[#allocation11 + $0xc00] sm:$0xff]
    %v893 = vld [vmem:[#allocation11 + $0xc08] sm:$0xff]
    %v894 = vld [vmem:[#allocation11 + $0xc10] sm:$0xff]
    %v895 = vld [vmem:[#allocation11 + $0xc18] sm:$0xff]
    %v896 = vld [vmem:[#allocation11 + $0xc20] sm:$0xff]
    %v897 = vld [vmem:[#allocation11 + $0xc28] sm:$0xff]
    %v898 = vld [vmem:[#allocation11 + $0xc30] sm:$0xff]
    %v899 = vld [vmem:[#allocation11 + $0xc38] sm:$0xff]
    %v900 = vld [vmem:[#allocation11 + $0xc40] sm:$0xff]
    %v901 = vld [vmem:[#allocation11 + $0xc48] sm:$0xff]
    %v902 = vld [vmem:[#allocation11 + $0xc50] sm:$0xff]
    %v903 = vld [vmem:[#allocation11 + $0xc58] sm:$0xff]
    %v904 = vld [vmem:[#allocation11 + $0xc60] sm:$0xff]
    %v905 = vld [vmem:[#allocation11 + $0xc68] sm:$0xff]
    %v906 = vld [vmem:[#allocation11 + $0xc70] sm:$0xff]
    %v907 = vld [vmem:[#allocation11 + $0xc78] sm:$0xff]
    %v908 = vld [vmem:[#allocation11 + $0xc80] sm:$0xff]
    %v909 = vld [vmem:[#allocation11 + $0xc88] sm:$0xff]
    %v910 = vld [vmem:[#allocation11 + $0xc90] sm:$0xff]
    %v911 = vld [vmem:[#allocation11 + $0xc98] sm:$0xff]
    %v912 = vld [vmem:[#allocation11 + $0xca0] sm:$0xff]
    %v913 = vld [vmem:[#allocation11 + $0xca8] sm:$0xff]
    %v914 = vld [vmem:[#allocation11 + $0xcb0] sm:$0xff]
    %v915 = vld [vmem:[#allocation11 + $0xcb8] sm:$0xff]
    %v916 = vld [vmem:[#allocation11 + $0xcc0] sm:$0xff]
    %v917 = vld [vmem:[#allocation11 + $0xcc8] sm:$0xff]
    %v918 = vld [vmem:[#allocation11 + $0xcd0] sm:$0xff]
    %v919 = vld [vmem:[#allocation11 + $0xcd8] sm:$0xff]
    %v920 = vld [vmem:[#allocation11 + $0xce0] sm:$0xff]
    %v921 = vld [vmem:[#allocation11 + $0xce8] sm:$0xff]
    %v922 = vld [vmem:[#allocation11 + $0xcf0] sm:$0xff]
    %v923 = vld [vmem:[#allocation11 + $0xcf8] sm:$0xff]
    %v924 = vld [vmem:[#allocation11 + $0xd00] sm:$0xff]
    %v925 = vld [vmem:[#allocation11 + $0xd08] sm:$0xff]
    %v926 = vld [vmem:[#allocation11 + $0xd10] sm:$0xff]
    %v927 = vld [vmem:[#allocation11 + $0xd18] sm:$0xff]
    %v928 = vld [vmem:[#allocation11 + $0xd20] sm:$0xff]
    %v929 = vld [vmem:[#allocation11 + $0xd28] sm:$0xff]
    %v930 = vld [vmem:[#allocation11 + $0xd30] sm:$0xff]
    %v931 = vld [vmem:[#allocation11 + $0xd38] sm:$0xff]
    %v932 = vld [vmem:[#allocation11 + $0xd40] sm:$0xff]
    %v933 = vld [vmem:[#allocation11 + $0xd48] sm:$0xff]
    %v934 = vld [vmem:[#allocation11 + $0xd50] sm:$0xff]
    %v935 = vld [vmem:[#allocation11 + $0xd58] sm:$0xff]
    %v936 = vld [vmem:[#allocation11 + $0xd60] sm:$0xff]
    %v937 = vld [vmem:[#allocation11 + $0xd68] sm:$0xff]
    %v938 = vld [vmem:[#allocation11 + $0xd70] sm:$0xff]
    %v939 = vld [vmem:[#allocation11 + $0xd78] sm:$0xff]
    %v940 = vld [vmem:[#allocation11 + $0xd80] sm:$0xff]
    %v941 = vld [vmem:[#allocation11 + $0xd88] sm:$0xff]
    %v942 = vld [vmem:[#allocation11 + $0xd90] sm:$0xff]
    %v943 = vld [vmem:[#allocation11 + $0xd98] sm:$0xff]
    %v944 = vld [vmem:[#allocation11 + $0xda0] sm:$0xff]
    %v945 = vld [vmem:[#allocation11 + $0xda8] sm:$0xff]
    %v946 = vld [vmem:[#allocation11 + $0xdb0] sm:$0xff]
    %v947 = vld [vmem:[#allocation11 + $0xdb8] sm:$0xff]
    %v948 = vld [vmem:[#allocation11 + $0xdc0] sm:$0xff]
    %v949 = vld [vmem:[#allocation11 + $0xdc8] sm:$0xff]
    %v950 = vld [vmem:[#allocation11 + $0xdd0] sm:$0xff]
    %v951 = vld [vmem:[#allocation11 + $0xdd8] sm:$0xff]
    %v952 = vld [vmem:[#allocation11 + $0xde0] sm:$0xff]
    %v953 = vld [vmem:[#allocation11 + $0xde8] sm:$0xff]
    %v954 = vld [vmem:[#allocation11 + $0xdf0] sm:$0xff]
    %v955 = vld [vmem:[#allocation11 + $0xdf8] sm:$0xff]
    %v956 = vld [vmem:[#allocation13] sm:$0xff]
    %v958 = vlaneseq
    %v959 = vshrl.u32 %v958, 7
    %v960 = vsub.s32 0, %v959
    %v961 = vrot.slane %v956, %v960
    %v962 = vlaneseq
    %v963 = vshrl.u32 %v962, 7
    %v964 = vsub.s32 1, %v963
    %v965 = vrot.slane %v956, %v964
    %v966 = vlaneseq
    %v967 = vshrl.u32 %v966, 7
    %v968 = vsub.s32 2, %v967
    %v969 = vrot.slane %v956, %v968
    %v970 = vlaneseq
    %v971 = vshrl.u32 %v970, 7
    %v972 = vsub.s32 3, %v971
    %v973 = vrot.slane %v956, %v972
    %v974 = vlaneseq
    %v975 = vshrl.u32 %v974, 7
    %v976 = vsub.s32 4, %v975
    %v977 = vrot.slane %v956, %v976
    %v978 = vlaneseq
    %v979 = vshrl.u32 %v978, 7
    %v980 = vsub.s32 5, %v979
    %v981 = vrot.slane %v956, %v980
    %v982 = vlaneseq
    %v983 = vshrl.u32 %v982, 7
    %v984 = vsub.s32 6, %v983
    %v985 = vrot.slane %v956, %v984
    %993 = vmatprep.subr.mxu0 %v509
    %994 = vmatpush1.msra.mxu0 %v508
    %995 = vmatprep.subr.mxu0 %v516
    %996 = vmatpush1.msra.mxu0 %v515
    %997 = vmatprep.subr.mxu0 %v523
    %998 = vmatpush1.msra.mxu0 %v522
    %999 = vmatprep.subr.mxu0 %v530
    %1000 = vmatpush1.msra.mxu0 %v529
    %1001 = vmatprep.subr.mxu0 %v537
    %1002 = vmatpush1.msra.mxu0 %v536
    %1003 = vmatprep.subr.mxu0 %v544
    %1004 = vmatpush1.msra.mxu0 %v543
    %1005 = vmatprep.subr.mxu0 %v551
    %1006 = vmatpush1.msra.mxu0 %v550
    %1007 = vmatprep.subr.mxu0 %v558
    %1008 = vmatpush1.msra.mxu0 %v557
    %1009 = vmatprep.subr.mxu0 %v565
    %1010 = vmatpush1.msra.mxu0 %v564
    %1011 = vmatprep.subr.mxu0 %v572
    %1012 = vmatpush1.msra.mxu0 %v571
    %1013 = vmatprep.subr.mxu0 %v579
    %1014 = vmatpush1.msra.mxu0 %v578
    %1015 = vmatprep.subr.mxu0 %v586
    %1016 = vmatpush1.msra.mxu0 %v585
    %1017 = vmatprep.subr.mxu0 %v593
    %1018 = vmatpush1.msra.mxu0 %v592
    %1019 = vmatprep.subr.mxu0 %v600
    %1020 = vmatpush1.msra.mxu0 %v599
    %1021 = vmatprep.subr.mxu0 %v607
    %1022 = vmatpush1.msra.mxu0 %v606
    %1023 = vmatprep.subr.mxu0 %v614
    %1024 = vmatpush1.msra.mxu0 %v613
    %1025 = vmatprep.subr.mxu0 %v621
    %1026 = vmatpush1.msra.mxu0 %v620
    %1027 = vmatprep.subr.mxu0 %v628
    %1028 = vmatpush1.msra.mxu0 %v627
    %1029 = vmatprep.subr.mxu0 %v635
    %1030 = vmatpush1.msra.mxu0 %v634
    %1031 = vmatprep.subr.mxu0 %v642
    %1032 = vmatpush1.msra.mxu0 %v641
    %1033 = vmatprep.subr.mxu0 %v649
    %1034 = vmatpush1.msra.mxu0 %v648
    %1035 = vmatprep.subr.mxu0 %v656
    %1036 = vmatpush1.msra.mxu0 %v655
    %1037 = vmatprep.subr.mxu0 %v663
    %1038 = vmatpush1.msra.mxu0 %v662
    %1039 = vmatprep.subr.mxu0 %v670
    %1040 = vmatpush1.msra.mxu0 %v669
    %1041 = vmatprep.subr.mxu0 %v677
    %1042 = vmatpush1.msra.mxu0 %v676
    %1043 = vmatprep.subr.mxu0 %v684
    %1044 = vmatpush1.msra.mxu0 %v683
    %1045 = vmatprep.subr.mxu0 %v691
    %1046 = vmatpush1.msra.mxu0 %v690
    %1047 = vmatprep.subr.mxu0 %v698
    %1048 = vmatpush1.msra.mxu0 %v697
    %1049 = vmatprep.subr.mxu0 %v705
    %1050 = vmatpush1.msra.mxu0 %v704
    %1051 = vmatprep.subr.mxu0 %v712
    %1052 = vmatpush1.msra.mxu0 %v711
    %1053 = vmatprep.subr.mxu0 %v719
    %1054 = vmatpush1.msra.mxu0 %v718
    %1055 = vmatprep.subr.mxu0 %v726
    %1056 = vmatpush1.msra.mxu0 %v725
    %1057 = vmatprep.mubr.f32.mxu0 %v505
    %1058 = vmatmul.mubr.f32.gmra.mrb[0].mxu0 %v504
    %v1059 = vpop.f32.mrb[0].mxu0
    %v1060 = vadd.f32 %v961, %v1059
    %v1061 = vpop.f32.mrb[0].mxu0
    %v1062 = vadd.f32 %v965, %v1061
    %1063 = vdwg.mxu0
    %1064 = vmatprep.subr.mxu0 %v733
    %1065 = vmatpush1.msra.mxu0 %v732
    %1066 = vmatprep.subr.mxu0 %v740
    %1067 = vmatpush1.msra.mxu0 %v739
    %1068 = vmatprep.subr.mxu0 %v747
    %1069 = vmatpush1.msra.mxu0 %v746
    %1070 = vmatprep.subr.mxu0 %v754
    %1071 = vmatpush1.msra.mxu0 %v753
    %1072 = vmatprep.subr.mxu0 %v761
    %1073 = vmatpush1.msra.mxu0 %v760
    %1074 = vmatprep.subr.mxu0 %v768
    %1075 = vmatpush1.msra.mxu0 %v767
    %1076 = vmatprep.subr.mxu0 %v775
    %1077 = vmatpush1.msra.mxu0 %v774
    %1078 = vmatprep.subr.mxu0 %v782
    %1079 = vmatpush1.msra.mxu0 %v781
    %1080 = vmatprep.subr.mxu0 %v789
    %1081 = vmatpush1.msra.mxu0 %v788
    %1082 = vmatprep.subr.mxu0 %v796
    %1083 = vmatpush1.msra.mxu0 %v795
    %1084 = vmatprep.subr.mxu0 %v803
    %1085 = vmatpush1.msra.mxu0 %v802
    %1086 = vmatprep.subr.mxu0 %v810
    %1087 = vmatpush1.msra.mxu0 %v809
    %1088 = vmatprep.subr.mxu0 %v817
    %1089 = vmatpush1.msra.mxu0 %v816
    %1090 = vmatprep.subr.mxu0 %v824
    %1091 = vmatpush1.msra.mxu0 %v823
    %1092 = vmatprep.subr.mxu0 %v831
    %1093 = vmatpush1.msra.mxu0 %v830
    %1094 = vmatprep.subr.mxu0 %v838
    %1095 = vmatpush1.msra.mxu0 %v837
    %1096 = vmatprep.subr.mxu0 %v845
    %1097 = vmatpush1.msra.mxu0 %v844
    %1098 = vmatprep.subr.mxu0 %v852
    %1099 = vmatpush1.msra.mxu0 %v851
    %1100 = vmatprep.subr.mxu0 %v859
    %1101 = vmatpush1.msra.mxu0 %v858
    %1102 = vmatprep.subr.mxu0 %v866
    %1103 = vmatpush1.msra.mxu0 %v865
    %1104 = vmatprep.subr.mxu0 %v873
    %1105 = vmatpush1.msra.mxu0 %v872
    %1106 = vmatprep.subr.mxu0 %v880
    %1107 = vmatpush1.msra.mxu0 %v879
    %1108 = vmatprep.subr.mxu0 %v887
    %1109 = vmatpush1.msra.mxu0 %v886
    %1110 = vmatprep.subr.mxu0 %v894
    %1111 = vmatpush1.msra.mxu0 %v893
    %1112 = vmatprep.subr.mxu0 %v901
    %1113 = vmatpush1.msra.mxu0 %v900
    %1114 = vmatprep.subr.mxu0 %v908
    %1115 = vmatpush1.msra.mxu0 %v907
    %1116 = vmatprep.subr.mxu0 %v915
    %1117 = vmatpush1.msra.mxu0 %v914
    %1118 = vmatprep.subr.mxu0 %v922
    %1119 = vmatpush1.msra.mxu0 %v921
    %1120 = vmatprep.subr.mxu0 %v929
    %1121 = vmatpush1.msra.mxu0 %v928
    %1122 = vmatprep.subr.mxu0 %v936
    %1123 = vmatpush1.msra.mxu0 %v935
    %1124 = vmatprep.subr.mxu0 %v943
    %1125 = vmatpush1.msra.mxu0 %v942
    %1126 = vmatprep.subr.mxu0 %v950
    %1127 = vmatpush1.msra.mxu0 %v949
    %1128 = vmatprep.mubr.f32.mxu0 %v507
    %1129 = vmatmul.mubr.f32.gmra.mrb[0].mxu0 %v506
    %v1130 = vpop.f32.mrb[0].mxu0
    %v1131 = vadd.f32 %v1060, %v1130
    %v1132 = vpop.f32.mrb[0].mxu0
    %v1133 = vadd.f32 %v1062, %v1132
    %1134 = vdwg.mxu0
    %1135 = vmatprep.subr.mxu0 %v511
    %1136 = vmatpush1.msra.mxu0 %v510
    %1137 = vmatprep.subr.mxu0 %v518
    %1138 = vmatpush1.msra.mxu0 %v517
    %1139 = vmatprep.subr.mxu0 %v525
    %1140 = vmatpush1.msra.mxu0 %v524
    %1141 = vmatprep.subr.mxu0 %v532
    %1142 = vmatpush1.msra.mxu0 %v531
    %1143 = vmatprep.subr.mxu0 %v539
    %1144 = vmatpush1.msra.mxu0 %v538
    %1145 = vmatprep.subr.mxu0 %v546
    %1146 = vmatpush1.msra.mxu0 %v545
    %1147 = vmatprep.subr.mxu0 %v553
    %1148 = vmatpush1.msra.mxu0 %v552
    %1149 = vmatprep.subr.mxu0 %v560
    %1150 = vmatpush1.msra.mxu0 %v559
    %1151 = vmatprep.subr.mxu0 %v567
    %1152 = vmatpush1.msra.mxu0 %v566
    %1153 = vmatprep.subr.mxu0 %v574
    %1154 = vmatpush1.msra.mxu0 %v573
    %1155 = vmatprep.subr.mxu0 %v581
    %1156 = vmatpush1.msra.mxu0 %v580
    %1157 = vmatprep.subr.mxu0 %v588
    %1158 = vmatpush1.msra.mxu0 %v587
    %1159 = vmatprep.subr.mxu0 %v595
    %1160 = vmatpush1.msra.mxu0 %v594
    %1161 = vmatprep.subr.mxu0 %v602
    %1162 = vmatpush1.msra.mxu0 %v601
    %1163 = vmatprep.subr.mxu0 %v609
    %1164 = vmatpush1.msra.mxu0 %v608
    %1165 = vmatprep.subr.mxu0 %v616
    %1166 = vmatpush1.msra.mxu0 %v615
    %1167 = vmatprep.subr.mxu0 %v623
    %1168 = vmatpush1.msra.mxu0 %v622
    %1169 = vmatprep.subr.mxu0 %v630
    %1170 = vmatpush1.msra.mxu0 %v629
    %1171 = vmatprep.subr.mxu0 %v637
    %1172 = vmatpush1.msra.mxu0 %v636
    %1173 = vmatprep.subr.mxu0 %v644
    %1174 = vmatpush1.msra.mxu0 %v643
    %1175 = vmatprep.subr.mxu0 %v651
    %1176 = vmatpush1.msra.mxu0 %v650
    %1177 = vmatprep.subr.mxu0 %v658
    %1178 = vmatpush1.msra.mxu0 %v657
    %1179 = vmatprep.subr.mxu0 %v665
    %1180 = vmatpush1.msra.mxu0 %v664
    %1181 = vmatprep.subr.mxu0 %v672
    %1182 = vmatpush1.msra.mxu0 %v671
    %1183 = vmatprep.subr.mxu0 %v679
    %1184 = vmatpush1.msra.mxu0 %v678
    %1185 = vmatprep.subr.mxu0 %v686
    %1186 = vmatpush1.msra.mxu0 %v685
    %1187 = vmatprep.subr.mxu0 %v693
    %1188 = vmatpush1.msra.mxu0 %v692
    %1189 = vmatprep.subr.mxu0 %v700
    %1190 = vmatpush1.msra.mxu0 %v699
    %1191 = vmatprep.subr.mxu0 %v707
    %1192 = vmatpush1.msra.mxu0 %v706
    %1193 = vmatprep.subr.mxu0 %v714
    %1194 = vmatpush1.msra.mxu0 %v713
    %1195 = vmatprep.subr.mxu0 %v721
    %1196 = vmatpush1.msra.mxu0 %v720
    %1197 = vmatprep.subr.mxu0 %v728
    %1198 = vmatpush1.msra.mxu0 %v727
    %1199 = vmatprep.mubr.f32.mxu0 %v505
    %1200 = vmatmul.mubr.f32.gmra.mrb[0].mxu0 %v504
    %v1201 = vpop.f32.mrb[0].mxu0
    %v1202 = vadd.f32 %v969, %v1201
    %v1203 = vpop.f32.mrb[0].mxu0
    %v1204 = vadd.f32 %v973, %v1203
    %1205 = vdwg.mxu0
    %1206 = vmatprep.subr.mxu0 %v735
    %1207 = vmatpush1.msra.mxu0 %v734
    %1208 = vmatprep.subr.mxu0 %v742
    %1209 = vmatpush1.msra.mxu0 %v741
    %1210 = vmatprep.subr.mxu0 %v749
    %1211 = vmatpush1.msra.mxu0 %v748
    %1212 = vmatprep.subr.mxu0 %v756
    %1213 = vmatpush1.msra.mxu0 %v755
    %1214 = vmatprep.subr.mxu0 %v763
    %1215 = vmatpush1.msra.mxu0 %v762
    %1216 = vmatprep.subr.mxu0 %v770
    %1217 = vmatpush1.msra.mxu0 %v769
    %1218 = vmatprep.subr.mxu0 %v777
    %1219 = vmatpush1.msra.mxu0 %v776
    %1220 = vmatprep.subr.mxu0 %v784
    %1221 = vmatpush1.msra.mxu0 %v783
    %1222 = vmatprep.subr.mxu0 %v791
    %1223 = vmatpush1.msra.mxu0 %v790
    %1224 = vmatprep.subr.mxu0 %v798
    %1225 = vmatpush1.msra.mxu0 %v797
    %1226 = vmatprep.subr.mxu0 %v805
    %1227 = vmatpush1.msra.mxu0 %v804
    %1228 = vmatprep.subr.mxu0 %v812
    %1229 = vmatpush1.msra.mxu0 %v811
    %1230 = vmatprep.subr.mxu0 %v819
    %1231 = vmatpush1.msra.mxu0 %v818
    %1232 = vmatprep.subr.mxu0 %v826
    %1233 = vmatpush1.msra.mxu0 %v825
    %1234 = vmatprep.subr.mxu0 %v833
    %1235 = vmatpush1.msra.mxu0 %v832
    %1236 = vmatprep.subr.mxu0 %v840
    %1237 = vmatpush1.msra.mxu0 %v839
    %1238 = vmatprep.subr.mxu0 %v847
    %1239 = vmatpush1.msra.mxu0 %v846
    %1240 = vmatprep.subr.mxu0 %v854
    %1241 = vmatpush1.msra.mxu0 %v853
    %1242 = vmatprep.subr.mxu0 %v861
    %1243 = vmatpush1.msra.mxu0 %v860
    %1244 = vmatprep.subr.mxu0 %v868
    %1245 = vmatpush1.msra.mxu0 %v867
    %1246 = vmatprep.subr.mxu0 %v875
    %1247 = vmatpush1.msra.mxu0 %v874
    %1248 = vmatprep.subr.mxu0 %v882
    %1249 = vmatpush1.msra.mxu0 %v881
    %1250 = vmatprep.subr.mxu0 %v889
    %1251 = vmatpush1.msra.mxu0 %v888
    %1252 = vmatprep.subr.mxu0 %v896
    %1253 = vmatpush1.msra.mxu0 %v895
    %1254 = vmatprep.subr.mxu0 %v903
    %1255 = vmatpush1.msra.mxu0 %v902
    %1256 = vmatprep.subr.mxu0 %v910
    %1257 = vmatpush1.msra.mxu0 %v909
    %1258 = vmatprep.subr.mxu0 %v917
    %1259 = vmatpush1.msra.mxu0 %v916
    %1260 = vmatprep.subr.mxu0 %v924
    %1261 = vmatpush1.msra.mxu0 %v923
    %1262 = vmatprep.subr.mxu0 %v931
    %1263 = vmatpush1.msra.mxu0 %v930
    %1264 = vmatprep.subr.mxu0 %v938
    %1265 = vmatpush1.msra.mxu0 %v937
    %1266 = vmatprep.subr.mxu0 %v945
    %1267 = vmatpush1.msra.mxu0 %v944
    %1268 = vmatprep.subr.mxu0 %v952
    %1269 = vmatpush1.msra.mxu0 %v951
    %1270 = vmatprep.mubr.f32.mxu0 %v507
    %1271 = vmatmul.mubr.f32.gmra.mrb[0].mxu0 %v506
    %v1272 = vpop.f32.mrb[0].mxu0
    %v1273 = vadd.f32 %v1202, %v1272
    %v1274 = vpop.f32.mrb[0].mxu0
    %v1275 = vadd.f32 %v1204, %v1274
    %1276 = vdwg.mxu0
    %1277 = vmatprep.subr.mxu0 %v513
    %1278 = vmatpush1.msra.mxu0 %v512
    %1279 = vmatprep.subr.mxu0 %v520
    %1280 = vmatpush1.msra.mxu0 %v519
    %1281 = vmatprep.subr.mxu0 %v527
    %1282 = vmatpush1.msra.mxu0 %v526
    %1283 = vmatprep.subr.mxu0 %v534
    %1284 = vmatpush1.msra.mxu0 %v533
    %1285 = vmatprep.subr.mxu0 %v541
    %1286 = vmatpush1.msra.mxu0 %v540
    %1287 = vmatprep.subr.mxu0 %v548
    %1288 = vmatpush1.msra.mxu0 %v547
    %1289 = vmatprep.subr.mxu0 %v555
    %1290 = vmatpush1.msra.mxu0 %v554
    %1291 = vmatprep.subr.mxu0 %v562
    %1292 = vmatpush1.msra.mxu0 %v561
    %1293 = vmatprep.subr.mxu0 %v569
    %1294 = vmatpush1.msra.mxu0 %v568
    %1295 = vmatprep.subr.mxu0 %v576
    %1296 = vmatpush1.msra.mxu0 %v575
    %1297 = vmatprep.subr.mxu0 %v583
    %1298 = vmatpush1.msra.mxu0 %v582
    %1299 = vmatprep.subr.mxu0 %v590
    %1300 = vmatpush1.msra.mxu0 %v589
    %1301 = vmatprep.subr.mxu0 %v597
    %1302 = vmatpush1.msra.mxu0 %v596
    %1303 = vmatprep.subr.mxu0 %v604
    %1304 = vmatpush1.msra.mxu0 %v603
    %1305 = vmatprep.subr.mxu0 %v611
    %1306 = vmatpush1.msra.mxu0 %v610
    %1307 = vmatprep.subr.mxu0 %v618
    %1308 = vmatpush1.msra.mxu0 %v617
    %1309 = vmatprep.subr.mxu0 %v625
    %1310 = vmatpush1.msra.mxu0 %v624
    %1311 = vmatprep.subr.mxu0 %v632
    %1312 = vmatpush1.msra.mxu0 %v631
    %1313 = vmatprep.subr.mxu0 %v639
    %1314 = vmatpush1.msra.mxu0 %v638
    %1315 = vmatprep.subr.mxu0 %v646
    %1316 = vmatpush1.msra.mxu0 %v645
    %1317 = vmatprep.subr.mxu0 %v653
    %1318 = vmatpush1.msra.mxu0 %v652
    %1319 = vmatprep.subr.mxu0 %v660
    %1320 = vmatpush1.msra.mxu0 %v659
    %1321 = vmatprep.subr.mxu0 %v667
    %1322 = vmatpush1.msra.mxu0 %v666
    %1323 = vmatprep.subr.mxu0 %v674
    %1324 = vmatpush1.msra.mxu0 %v673
    %1325 = vmatprep.subr.mxu0 %v681
    %1326 = vmatpush1.msra.mxu0 %v680
    %1327 = vmatprep.subr.mxu0 %v688
    %1328 = vmatpush1.msra.mxu0 %v687
    %1329 = vmatprep.subr.mxu0 %v695
    %1330 = vmatpush1.msra.mxu0 %v694
    %1331 = vmatprep.subr.mxu0 %v702
    %1332 = vmatpush1.msra.mxu0 %v701
    %1333 = vmatprep.subr.mxu0 %v709
    %1334 = vmatpush1.msra.mxu0 %v708
    %1335 = vmatprep.subr.mxu0 %v716
    %1336 = vmatpush1.msra.mxu0 %v715
    %1337 = vmatprep.subr.mxu0 %v723
    %1338 = vmatpush1.msra.mxu0 %v722
    %1339 = vmatprep.subr.mxu0 %v730
    %1340 = vmatpush1.msra.mxu0 %v729
    %1341 = vmatprep.mubr.f32.mxu0 %v505
    %1342 = vmatmul.mubr.f32.gmra.mrb[0].mxu0 %v504
    %v1343 = vpop.f32.mrb[0].mxu0
    %v1344 = vadd.f32 %v977, %v1343
    %v1345 = vpop.f32.mrb[0].mxu0
    %v1346 = vadd.f32 %v981, %v1345
    %1347 = vdwg.mxu0
    %1348 = vmatprep.subr.mxu0 %v737
    %1349 = vmatpush1.msra.mxu0 %v736
    %1350 = vmatprep.subr.mxu0 %v744
    %1351 = vmatpush1.msra.mxu0 %v743
    %1352 = vmatprep.subr.mxu0 %v751
    %1353 = vmatpush1.msra.mxu0 %v750
    %1354 = vmatprep.subr.mxu0 %v758
    %1355 = vmatpush1.msra.mxu0 %v757
    %1356 = vmatprep.subr.mxu0 %v765
    %1357 = vmatpush1.msra.mxu0 %v764
    %1358 = vmatprep.subr.mxu0 %v772
    %1359 = vmatpush1.msra.mxu0 %v771
    %1360 = vmatprep.subr.mxu0 %v779
    %1361 = vmatpush1.msra.mxu0 %v778
    %1362 = vmatprep.subr.mxu0 %v786
    %1363 = vmatpush1.msra.mxu0 %v785
    %1364 = vmatprep.subr.mxu0 %v793
    %1365 = vmatpush1.msra.mxu0 %v792
    %1366 = vmatprep.subr.mxu0 %v800
    %1367 = vmatpush1.msra.mxu0 %v799
    %1368 = vmatprep.subr.mxu0 %v807
    %1369 = vmatpush1.msra.mxu0 %v806
    %1370 = vmatprep.subr.mxu0 %v814
    %1371 = vmatpush1.msra.mxu0 %v813
    %1372 = vmatprep.subr.mxu0 %v821
    %1373 = vmatpush1.msra.mxu0 %v820
    %1374 = vmatprep.subr.mxu0 %v828
    %1375 = vmatpush1.msra.mxu0 %v827
    %1376 = vmatprep.subr.mxu0 %v835
    %1377 = vmatpush1.msra.mxu0 %v834
    %1378 = vmatprep.subr.mxu0 %v842
    %1379 = vmatpush1.msra.mxu0 %v841
    %1380 = vmatprep.subr.mxu0 %v849
    %1381 = vmatpush1.msra.mxu0 %v848
    %1382 = vmatprep.subr.mxu0 %v856
    %1383 = vmatpush1.msra.mxu0 %v855
    %1384 = vmatprep.subr.mxu0 %v863
    %1385 = vmatpush1.msra.mxu0 %v862
    %1386 = vmatprep.subr.mxu0 %v870
    %1387 = vmatpush1.msra.mxu0 %v869
    %1388 = vmatprep.subr.mxu0 %v877
    %1389 = vmatpush1.msra.mxu0 %v876
    %1390 = vmatprep.subr.mxu0 %v884
    %1391 = vmatpush1.msra.mxu0 %v883
    %1392 = vmatprep.subr.mxu0 %v891
    %1393 = vmatpush1.msra.mxu0 %v890
    %1394 = vmatprep.subr.mxu0 %v898
    %1395 = vmatpush1.msra.mxu0 %v897
    %1396 = vmatprep.subr.mxu0 %v905
    %1397 = vmatpush1.msra.mxu0 %v904
    %1398 = vmatprep.subr.mxu0 %v912
    %1399 = vmatpush1.msra.mxu0 %v911
    %1400 = vmatprep.subr.mxu0 %v919
    %1401 = vmatpush1.msra.mxu0 %v918
    %1402 = vmatprep.subr.mxu0 %v926
    %1403 = vmatpush1.msra.mxu0 %v925
    %1404 = vmatprep.subr.mxu0 %v933
    %1405 = vmatpush1.msra.mxu0 %v932
    %1406 = vmatprep.subr.mxu0 %v940
    %1407 = vmatpush1.msra.mxu0 %v939
    %1408 = vmatprep.subr.mxu0 %v947
    %1409 = vmatpush1.msra.mxu0 %v946
    %1410 = vmatprep.subr.mxu0 %v954
    %1411 = vmatpush1.msra.mxu0 %v953
    %1412 = vmatprep.mubr.f32.mxu0 %v507
    %1413 = vmatmul.mubr.f32.gmra.mrb[0].mxu0 %v506
    %v1414 = vpop.f32.mrb[0].mxu0
    %v1415 = vadd.f32 %v1344, %v1414
    %v1416 = vpop.f32.mrb[0].mxu0
    %v1417 = vadd.f32 %v1346, %v1416
    %1418 = vdwg.mxu0
    %1419 = vmatprep.subr.mxu0 0.0
    %1420 = vmatpush1.msra.mxu0 %v514
    %1421 = vmatprep.subr.mxu0 0.0
    %1422 = vmatpush1.msra.mxu0 %v521
    %1423 = vmatprep.subr.mxu0 0.0
    %1424 = vmatpush1.msra.mxu0 %v528
    %1425 = vmatprep.subr.mxu0 0.0
    %1426 = vmatpush1.msra.mxu0 %v535
    %1427 = vmatprep.subr.mxu0 0.0
    %1428 = vmatpush1.msra.mxu0 %v542
    %1429 = vmatprep.subr.mxu0 0.0
    %1430 = vmatpush1.msra.mxu0 %v549
    %1431 = vmatprep.subr.mxu0 0.0
    %1432 = vmatpush1.msra.mxu0 %v556
    %1433 = vmatprep.subr.mxu0 0.0
    %1434 = vmatpush1.msra.mxu0 %v563
    %1435 = vmatprep.subr.mxu0 0.0
    %1436 = vmatpush1.msra.mxu0 %v570
    %1437 = vmatprep.subr.mxu0 0.0
    %1438 = vmatpush1.msra.mxu0 %v577
    %1439 = vmatprep.subr.mxu0 0.0
    %1440 = vmatpush1.msra.mxu0 %v584
    %1441 = vmatprep.subr.mxu0 0.0
    %1442 = vmatpush1.msra.mxu0 %v591
    %1443 = vmatprep.subr.mxu0 0.0
    %1444 = vmatpush1.msra.mxu0 %v598
    %1445 = vmatprep.subr.mxu0 0.0
    %1446 = vmatpush1.msra.mxu0 %v605
    %1447 = vmatprep.subr.mxu0 0.0
    %1448 = vmatpush1.msra.mxu0 %v612
    %1449 = vmatprep.subr.mxu0 0.0
    %1450 = vmatpush1.msra.mxu0 %v619
    %1451 = vmatprep.subr.mxu0 0.0
    %1452 = vmatpush1.msra.mxu0 %v626
    %1453 = vmatprep.subr.mxu0 0.0
    %1454 = vmatpush1.msra.mxu0 %v633
    %1455 = vmatprep.subr.mxu0 0.0
    %1456 = vmatpush1.msra.mxu0 %v640
    %1457 = vmatprep.subr.mxu0 0.0
    %1458 = vmatpush1.msra.mxu0 %v647
    %1459 = vmatprep.subr.mxu0 0.0
    %1460 = vmatpush1.msra.mxu0 %v654
    %1461 = vmatprep.subr.mxu0 0.0
    %1462 = vmatpush1.msra.mxu0 %v661
    %1463 = vmatprep.subr.mxu0 0.0
    %1464 = vmatpush1.msra.mxu0 %v668
    %1465 = vmatprep.subr.mxu0 0.0
    %1466 = vmatpush1.msra.mxu0 %v675
    %1467 = vmatprep.subr.mxu0 0.0
    %1468 = vmatpush1.msra.mxu0 %v682
    %1469 = vmatprep.subr.mxu0 0.0
    %1470 = vmatpush1.msra.mxu0 %v689
    %1471 = vmatprep.subr.mxu0 0.0
    %1472 = vmatpush1.msra.mxu0 %v696
    %1473 = vmatprep.subr.mxu0 0.0
    %1474 = vmatpush1.msra.mxu0 %v703
    %1475 = vmatprep.subr.mxu0 0.0
    %1476 = vmatpush1.msra.mxu0 %v710
    %1477 = vmatprep.subr.mxu0 0.0
    %1478 = vmatpush1.msra.mxu0 %v717
    %1479 = vmatprep.subr.mxu0 0.0
    %1480 = vmatpush1.msra.mxu0 %v724
    %1481 = vmatprep.subr.mxu0 0.0
    %1482 = vmatpush1.msra.mxu0 %v731
    %1483 = vmatprep.mubr.f32.mxu0 %v505
    %1484 = vmatmul.mubr.f32.gmra.mrb[0].mxu0 %v504
    %v1485 = vpop.f32.mrb[0].mxu0
    %v1486 = vadd.f32 %v985, %v1485
    %v1487 = vpop.f32.mrb[0].mxu0
    %1488 = vdwg.mxu0
    %1489 = vmatprep.subr.mxu0 0.0
    %1490 = vmatpush1.msra.mxu0 %v738
    %1491 = vmatprep.subr.mxu0 0.0
    %1492 = vmatpush1.msra.mxu0 %v745
    %1493 = vmatprep.subr.mxu0 0.0
    %1494 = vmatpush1.msra.mxu0 %v752
    %1495 = vmatprep.subr.mxu0 0.0
    %1496 = vmatpush1.msra.mxu0 %v759
    %1497 = vmatprep.subr.mxu0 0.0
    %1498 = vmatpush1.msra.mxu0 %v766
    %1499 = vmatprep.subr.mxu0 0.0
    %1500 = vmatpush1.msra.mxu0 %v773
    %1501 = vmatprep.subr.mxu0 0.0
    %1502 = vmatpush1.msra.mxu0 %v780
    %1503 = vmatprep.subr.mxu0 0.0
    %1504 = vmatpush1.msra.mxu0 %v787
    %1505 = vmatprep.subr.mxu0 0.0
    %1506 = vmatpush1.msra.mxu0 %v794
    %1507 = vmatprep.subr.mxu0 0.0
    %1508 = vmatpush1.msra.mxu0 %v801
    %1509 = vmatprep.subr.mxu0 0.0
    %1510 = vmatpush1.msra.mxu0 %v808
    %1511 = vmatprep.subr.mxu0 0.0
    %1512 = vmatpush1.msra.mxu0 %v815
    %1513 = vmatprep.subr.mxu0 0.0
    %1514 = vmatpush1.msra.mxu0 %v822
    %1515 = vmatprep.subr.mxu0 0.0
    %1516 = vmatpush1.msra.mxu0 %v829
    %1517 = vmatprep.subr.mxu0 0.0
    %1518 = vmatpush1.msra.mxu0 %v836
    %1519 = vmatprep.subr.mxu0 0.0
    %1520 = vmatpush1.msra.mxu0 %v843
    %1521 = vmatprep.subr.mxu0 0.0
    %1522 = vmatpush1.msra.mxu0 %v850
    %1523 = vmatprep.subr.mxu0 0.0
    %1524 = vmatpush1.msra.mxu0 %v857
    %1525 = vmatprep.subr.mxu0 0.0
    %1526 = vmatpush1.msra.mxu0 %v864
    %1527 = vmatprep.subr.mxu0 0.0
    %1528 = vmatpush1.msra.mxu0 %v871
    %1529 = vmatprep.subr.mxu0 0.0
    %1530 = vmatpush1.msra.mxu0 %v878
    %1531 = vmatprep.subr.mxu0 0.0
    %1532 = vmatpush1.msra.mxu0 %v885
    %1533 = vmatprep.subr.mxu0 0.0
    %1534 = vmatpush1.msra.mxu0 %v892
    %1535 = vmatprep.subr.mxu0 0.0
    %1536 = vmatpush1.msra.mxu0 %v899
    %1537 = vmatprep.subr.mxu0 0.0
    %1538 = vmatpush1.msra.mxu0 %v906
    %1539 = vmatprep.subr.mxu0 0.0
    %1540 = vmatpush1.msra.mxu0 %v913
    %1541 = vmatprep.subr.mxu0 0.0
    %1542 = vmatpush1.msra.mxu0 %v920
    %1543 = vmatprep.subr.mxu0 0.0
    %1544 = vmatpush1.msra.mxu0 %v927
    %1545 = vmatprep.subr.mxu0 0.0
    %1546 = vmatpush1.msra.mxu0 %v934
    %1547 = vmatprep.subr.mxu0 0.0
    %1548 = vmatpush1.msra.mxu0 %v941
    %1549 = vmatprep.subr.mxu0 0.0
    %1550 = vmatpush1.msra.mxu0 %v948
    %1551 = vmatprep.subr.mxu0 0.0
    %1552 = vmatpush1.msra.mxu0 %v955
    %1553 = vmatprep.mubr.f32.mxu0 %v507
    %1554 = vmatmul.mubr.f32.gmra.mrb[0].mxu0 %v506
    %v1555 = vpop.f32.mrb[0].mxu0
    %v1556 = vadd.f32 %v1486, %v1555
    %v1557 = vpop.f32.mrb[0].mxu0
    %1558 = vdwg.mxu0
    %v1559 = vxor.u32 %v1131, 2147483648
    %v1560 = vxor.u32 %v1133, 2147483648
    %v1561 = vxor.u32 %v1273, 2147483648
    %v1562 = vxor.u32 %v1275, 2147483648
    %v1563 = vxor.u32 %v1415, 2147483648
    %v1564 = vxor.u32 %v1417, 2147483648
    %v1565 = vxor.u32 %v1556, 2147483648
    %v1566 = vmul.f32 %v1559, 1.442695
    %v1567 = vpow.pop %v1566
    %v1568 = vmul.f32 %v1560, 1.442695
    %v1569 = vpow.pop %v1568
    %v1570 = vmul.f32 %v1561, 1.442695
    %v1571 = vpow.pop %v1570
    %v1572 = vmul.f32 %v1562, 1.442695
    %v1573 = vpow.pop %v1572
    %v1574 = vmul.f32 %v1563, 1.442695
    %v1575 = vpow.pop %v1574
    %v1576 = vmul.f32 %v1564, 1.442695
    %v1577 = vpow.pop %v1576
    %v1578 = vmul.f32 %v1565, 1.442695
    %v1579 = vpow.pop %v1578
    %v1580 = vadd.f32 %v1567, 1.0
    %v1581 = vadd.f32 %v1569, 1.0
    %v1582 = vadd.f32 %v1571, 1.0
    %v1583 = vadd.f32 %v1573, 1.0
    %v1584 = vadd.f32 %v1575, 1.0
    %v1585 = vadd.f32 %v1577, 1.0
    %v1586 = vadd.f32 %v1579, 1.0
    %v1587 = vrcp.pop %v1580
    %v1588 = vmul.f32 1.0, %v1587
    %v1589 = vrcp.pop %v1581
    %v1590 = vmul.f32 1.0, %v1589
    %v1591 = vrcp.pop %v1582
    %v1592 = vmul.f32 1.0, %v1591
    %v1593 = vrcp.pop %v1583
    %v1594 = vmul.f32 1.0, %v1593
    %v1595 = vrcp.pop %v1584
    %v1596 = vmul.f32 1.0, %v1595
    %v1597 = vrcp.pop %v1585
    %v1598 = vmul.f32 1.0, %v1597
    %v1599 = vrcp.pop %v1586
    %v1600 = vmul.f32 1.0, %v1599
    %1601 = vst [vmem:[#allocation14] sm:$0xff] %v1588
    %1602 = vst [vmem:[#allocation14 + $0x8] sm:$0xff] %v1590
    %1603 = vst [vmem:[#allocation14 + $0x10] sm:$0xff] %v1592
    %1604 = vst [vmem:[#allocation14 + $0x18] sm:$0xff] %v1594
    %1605 = vst [vmem:[#allocation14 + $0x20] sm:$0xff] %v1596
    %1606 = vst [vmem:[#allocation14 + $0x28] sm:$0xff] %v1598
    %1607 = vst [vmem:[#allocation14 + $0x30] sm:$0xff] %v1600
    // Predicated region
    $region58: #{tpu_custom_call.1} parent=1 // pred_check
      _
    $region59: #{tpu_custom_call.1} parent=1 // pred_check_branch
      %1609 = sbr.rel (0) target = $region61
    $region60: #{tpu_custom_call.1} parent=1 // pred_region
      %s1611 = ssub.s32 896, 896
      %1612 = vsyncadd [#allocation4], %s1611
      %s1614 = sshll.u32 [#allocation14], 4
      %s1615 = int_to_ptr.vmem [resolvable:$true] %s1614
      %1617 = dma.vmem_to_hbm [thread:$0]  %s1615, 896, %s7, [#allocation4]
    $region61: #{tpu_custom_call.1} parent=1 // pred_fallthru
      _
    // Predicated region
    $region62: #{tpu_custom_call.1} parent=1 // pred_check
      _
    $region63: #{tpu_custom_call.1} parent=1 // pred_check_branch
      %1619 = sbr.rel (0) target = $region65
    $region64: #{tpu_custom_call.1} parent=1 // pred_region
      %1620 = dma.done [#allocation4], 896
    $region65: #{tpu_custom_call.1} parent=1 // pred_fallthru
      _
    %1621 = vsyncpa [#allocation3], 1
    %1622 = vsyncpa [#allocation6], 1
    %1623 = vsyncpa [#allocation9], 1
    %1624 = vsyncpa [#allocation12], 1
    %1625 = vsyncpa [#allocation4], 1

</llo_original>
